<compile_context>
chip_gen: v7x
topology: tpu7x:2x2x1
jax: 0.10.0
libtpu: 0.0.40
codegen_flags: <defaults>
</compile_context>

<pallas_src>
import jax
import jax.numpy as jnp
from jax.experimental import pallas as pl
from jax.experimental.pallas import tpu as pltpu  # noqa: F401  (TPU backend import)


# ---------------------------------------------------------------------------
# Pallas kernels
# ---------------------------------------------------------------------------

def _gcn_stack_kernel(a_ref, x0_ref, w_ref, b_ref, wl_ref, bl_ref, o_ref):
    """Fused GCN stack: o[:, :D_total] = concat_l tanh(A_hat @ (X_l @ W_l) + b_l).

    a_ref  : [N, N]     bf16  normalized adjacency (block-diagonal, batched)
    x0_ref : [N, H]     bf16  initial node features (z embedding)
    w_ref  : [L, H, H]  bf16  hidden GraphConv weights
    b_ref  : [L, 1, H]  f32   hidden GraphConv biases
    wl_ref : [H, 128]   bf16  final (H -> 1) weight, lane-padded with zeros
    bl_ref : [1, 128]   f32   final bias, lane-padded with zeros
    o_ref  : [N, 128]   f32   feature slab; columns [0 .. L*H] are real
    """
    num_hidden = w_ref.shape[0]
    hidden = w_ref.shape[2]
    a = a_ref[...]                                   # stays VMEM-resident across layers
    x = x0_ref[...]
    cols = []
    for l in range(num_hidden):                      # static unroll (L is small)
        xw = jnp.dot(x, w_ref[l], preferred_element_type=jnp.float32)
        agg = jnp.dot(a, xw.astype(jnp.bfloat16), preferred_element_type=jnp.float32)
        h = jnp.tanh(agg + b_ref[l])                 # f32 [N, H]
        cols.append(h)
        x = h.astype(jnp.bfloat16)
    # Final (hidden -> 1) layer, lane-padded: only column 0 is non-zero.
    xw = jnp.dot(x, wl_ref[...], preferred_element_type=jnp.float32)
    agg = jnp.dot(a, xw.astype(jnp.bfloat16), preferred_element_type=jnp.float32)
    hl = jnp.tanh(agg + bl_ref[...])                 # f32 [N, 128]
    cols.append(hl[:, : 128 - num_hidden * hidden])
    o_ref[...] = jnp.concatenate(cols, axis=-1)      # single lane-dense [N,128] store


def _head_kernel(xk_ref, w1_ref, b1_ref, w2_ref, b2_ref, w3_ref, b3_ref,
                 w4_ref, b4_ref, o_ref):
    """Fused post-pooling head.

    xk_ref : [B*k, 128]          bf16  pooled per-node features (K padded 97->128)
    w1_ref : [128, 16]           bf16  conv_1 weight (padded), b1_ref [1,16] f32
    w2_ref : [128, l_out*32]     bf16  conv_2 as block-Toeplitz matmul, b2 [1,l_out*32]
    w3_ref : [l_out*32, 128]     bf16  linear_1 (columns pre-permuted), b3 [1,128]
    w4_ref : [128, 128]          bf16  linear_2 lane-padded, b4 [1,128]
    o_ref  : [B, 128]            f32   column 0 holds the real output
    """
    batch = o_ref.shape[0]
    k = xk_ref.shape[0] // batch
    l_in = k // 2

    # conv_1 (Conv1d(1, 16, D_total, D_total)) + ReLU  ==  [B*k,128] @ [128,16]
    y1 = jnp.dot(xk_ref[...], w1_ref[...], preferred_element_type=jnp.float32)
    y1 = jnp.maximum(y1 + b1_ref[...], 0.0)          # [B*k, 16] f32

    # MaxPool1d(2, 2) over time + per-graph flatten to (time, channel) order,
    # zero-padded to 128 lanes.  All static slices/concats on VMEM values.
    rows = []
    for b in range(batch):
        segs = []
        for j in range(l_in):
            r0 = y1[b * k + 2 * j:     b * k + 2 * j + 1, :]
            r1 = y1[b * k + 2 * j + 1: b * k + 2 * j + 2, :]
            segs.append(jnp.maximum(r0, r1))
        if l_in * 16 < 128:
            segs.append(jnp.zeros((1, 128 - l_in * 16), jnp.float32))
        rows.append(jnp.concatenate(segs, axis=1))   # [1, 128]
    y1p = jnp.concatenate(rows, axis=0)              # [B, 128]

    # conv_2 (Conv1d(16, 32, 5)) + ReLU, folded into one block-Toeplitz matmul.
    y2 = jnp.dot(y1p.astype(jnp.bfloat16), w2_ref[...],
                 preferred_element_type=jnp.float32)
    y2 = jnp.maximum(y2 + b2_ref[...], 0.0)          # [B, l_out*32]

    # linear_1 + ReLU
    y3 = jnp.dot(y2.astype(jnp.bfloat16), w3_ref[...],
                 preferred_element_type=jnp.float32)
    y3 = jnp.maximum(y3 + b3_ref[...], 0.0)          # [B, 128]

    # F.dropout result is discarded in the reference -> no-op.
    # linear_2 (lane-padded so this is a full-width, unmasked store).
    o_ref[...] = jnp.dot(y3.astype(jnp.bfloat16), w4_ref[...],
                         preferred_element_type=jnp.float32) + b4_ref[...]


# ---------------------------------------------------------------------------
# Pallas wrappers
# ---------------------------------------------------------------------------

def gcn_stack(a_hat_bf16, x0_bf16, packed):
    n = a_hat_bf16.shape[0]
    return pl.pallas_call(
        _gcn_stack_kernel,
        out_shape=jax.ShapeDtypeStruct((n, 128), jnp.float32),
    )(a_hat_bf16, x0_bf16, packed["gcn_w"], packed["gcn_b"],
      packed["gcn_wl"], packed["gcn_bl"])


def head(xk_bf16, packed, batch):
    return pl.pallas_call(
        _head_kernel,
        out_shape=jax.ShapeDtypeStruct((batch, 128), jnp.float32),
    )(xk_bf16, packed["w1"], packed["b1"], packed["w2"], packed["b2"],
      packed["w3"], packed["b3"], packed["w4"], packed["b4"])


# ---------------------------------------------------------------------------
# One-time parameter packing (bf16 casts, lane/K padding, conv_2 Toeplitz fold)
# ---------------------------------------------------------------------------

def pack_params(params, k):
    hidden = params["z_emb"].shape[1]
    num_hidden = len(params["gcn_w"]) - 1
    d_total = hidden * num_hidden + 1
    kw = 5
    l_in = k // 2
    l_out = l_in - kw + 1
    assert d_total <= 128, "feature slab assumes hidden*num_layers + 1 <= 128"
    assert l_out >= 1 and l_in * 16 <= 128

    p = {"z_emb": params["z_emb"]}

    # Fused GCN stack: stack hidden layers, lane-pad the final (H -> 1) layer.
    p["gcn_w"] = jnp.stack(params["gcn_w"][:-1]).astype(jnp.bfloat16)            # [L,H,H]
    p["gcn_b"] = jnp.stack(params["gcn_b"][:-1]).reshape(num_hidden, 1, hidden)  # [L,1,H]
    p["gcn_wl"] = jnp.pad(params["gcn_w"][-1], ((0, 0), (0, 127))).astype(jnp.bfloat16)
    p["gcn_bl"] = jnp.pad(params["gcn_b"][-1], (0, 127)).reshape(1, 128)

    # conv_1: Conv1d(1, 16, d_total, d_total) == [B*k, d_total] @ [d_total, 16].
    w1 = params["w_conv1"].reshape(16, d_total).T
    p["w1"] = jnp.pad(w1, ((0, 128 - d_total), (0, 0))).astype(jnp.bfloat16)     # K->128
    p["b1"] = params["b_conv1"].reshape(1, 16)

    # conv_2: Conv1d(16, 32, 5, 1) folded into one block-Toeplitz matmul acting
    # on the (time, channel)-flattened, zero-padded [B, 128] pooled activations.
    w2_slab = params["w_conv2"].transpose(2, 1, 0).reshape(kw * 16, 32)          # [(j,c), o]
    w2_big = jnp.zeros((128, l_out * 32), jnp.float32)
    for t in range(l_out):
        w2_big = w2_big.at[t * 16:(t + kw) * 16, t * 32:(t + 1) * 32].set(w2_slab)
    p["w2"] = w2_big.astype(jnp.bfloat16)
    p["b2"] = jnp.tile(params["b_conv2"], l_out).reshape(1, l_out * 32)

    # linear_1: permute columns from PyTorch's (channel, time) flatten order to
    # the kernel's (time, channel) order, transpose to [K, 128].
    w3 = params["w_lin1"].reshape(128, 32, l_out).transpose(2, 1, 0).reshape(l_out * 32, 128)
    p["w3"] = w3.astype(jnp.bfloat16)
    p["b3"] = params["b_lin1"].reshape(1, 128)

    # linear_2: lane-pad [128, 1] -> [128, 128] so the final store is lane-dense.
    p["w4"] = jnp.pad(params["w_lin2"].T, ((0, 0), (0, 127))).astype(jnp.bfloat16)
    p["b4"] = jnp.pad(params["b_lin2"], (0, 127)).reshape(1, 128)
    return p


# ---------------------------------------------------------------------------
# JAX glue (embedding gather, SortPooling) + full forward
# ---------------------------------------------------------------------------

def sort_pooling(feat, batch, n_per_graph, k):
    """DGL SortPooling: sort each node's features ascending, then order the
    nodes of each graph by their last (sorted) feature descending, keep top-k.
    NOTE: tie ordering may differ from DGL's topk (numerically valid)."""
    d = feat.shape[-1]
    f = jnp.sort(feat, axis=-1)
    f = f.reshape(batch, n_per_graph, d)
    order = jnp.argsort(-f[:, :, -1], axis=1)
    f = jnp.take_along_axis(f, order[:, :, None], axis=1)
    if n_per_graph >= k:
        f = f[:, :k]
    else:
        f = jnp.pad(f, ((0, 0), (0, k - n_per_graph), (0, 0)))
    return f.reshape(batch, k * d)


def dgcnn_forward(a_hat, z, packed, *, batch, n_per_graph, k):
    num_hidden = packed["gcn_w"].shape[0]
    hidden = packed["gcn_w"].shape[2]
    d_total = hidden * num_hidden + 1

    # Embedding lookup (gather) -- JAX glue.
    x0 = jnp.take(packed["z_emb"], z, axis=0).astype(jnp.bfloat16)        # [N, H]

    # Fused GCN stack (all layers + tanh + concat) -- one Pallas kernel.
    # TODO(synk): for large N, tile the A_hat aggregation over (row, K) blocks
    # (parallel row axis, arbitrary reduction axis) instead of whole-array VMEM.
    slab = gcn_stack(a_hat.astype(jnp.bfloat16), x0, packed)              # [N, 128]
    feat = slab[:, :d_total]                                              # [N, D_total]

    # SortPooling -> [B, k * d_total]  (sorting: JAX glue).
    pooled = sort_pooling(feat, batch, n_per_graph, k)

    # Fused conv_1 / maxpool / conv_2 / linear_1 / linear_2 head -- one kernel.
    xk = pooled.reshape(batch * k, d_total)
    xk = jnp.pad(xk, ((0, 0), (0, 128 - d_total))).astype(jnp.bfloat16)   # K 97 -> 128
    out = head(xk, packed, batch)                                         # [B, 128]
    return out[:, :1]                                                     # [B, 1]


# ---------------------------------------------------------------------------
# Example run
# ---------------------------------------------------------------------------

if __name__ == "__main__":
    key = jax.random.PRNGKey(0)
    keys = jax.random.split(key, 16)

    B, n_per, hidden, num_layers, k, max_z = 2, 12, 32, 3, 10, 50
    N = B * n_per
    d_total = hidden * num_layers + 1

    # ----- deterministic parameters (shapes from DGCNN.__init__) -----
    params = {}
    params["z_emb"] = 0.1 * jax.random.normal(keys[0], (max_z, hidden), jnp.float32)

    gcn_dims = [(hidden, hidden)] * num_layers + [(hidden, 1)]
    params["gcn_w"] = []
    params["gcn_b"] = []
    for i, (ci, co) in enumerate(gcn_dims):
        params["gcn_w"].append(
            jax.random.normal(keys[1 + i], (ci, co), jnp.float32) / jnp.sqrt(float(ci)))
        params["gcn_b"].append(jnp.zeros((co,), jnp.float32))

    params["w_conv1"] = 0.1 * jax.random.normal(keys[6], (16, 1, d_total), jnp.float32)
    params["b_conv1"] = jnp.zeros((16,), jnp.float32)
    params["w_conv2"] = 0.1 * jax.random.normal(keys[7], (32, 16, 5), jnp.float32)
    params["b_conv2"] = jnp.zeros((32,), jnp.float32)

    dense_dim = (int((k - 2) / 2 + 1) - 5 + 1) * 32
    params["w_lin1"] = 0.1 * jax.random.normal(keys[8], (128, dense_dim), jnp.float32)
    params["b_lin1"] = jnp.zeros((128,), jnp.float32)
    params["w_lin2"] = 0.1 * jax.random.normal(keys[9], (1, 128), jnp.float32)
    params["b_lin2"] = jnp.zeros((1,), jnp.float32)

    packed = pack_params(params, k)

    # ----- synthetic batched graph: block-diagonal adjacency with self-loops -----
    adj_blocks = (jax.random.uniform(keys[10], (B, n_per, n_per)) < 0.3).astype(jnp.float32)
    adj_blocks = jnp.maximum(adj_blocks, jnp.eye(n_per, dtype=jnp.float32)[None])
    adj = jnp.zeros((N, N), jnp.float32)
    for b in range(B):
        adj = adj.at[b * n_per:(b + 1) * n_per, b * n_per:(b + 1) * n_per].set(adj_blocks[b])
    # adj[v, u] = 1  <=>  edge u -> v ; normalize like DGL GraphConv norm='both'
    out_deg = jnp.maximum(adj.sum(axis=0), 1.0)
    in_deg = jnp.maximum(adj.sum(axis=1), 1.0)
    a_hat = (in_deg ** -0.5)[:, None] * adj * (out_deg ** -0.5)[None, :]

    # node labeling tensor z
    z = jax.random.randint(keys[11], (N,), 0, max_z)

    fwd = jax.jit(dgcnn_forward, static_argnames=("batch", "n_per_graph", "k"))
    out = fwd(a_hat, z, packed, batch=B, n_per_graph=n_per, k=k)
    out = jax.block_until_ready(out)
    assert out.shape == (B, 1) and out.dtype == jnp.float32
    print("KERNEL_OK")
</pallas_src>

<mosaic_0001>
module attributes {stable_mosaic.version = 11 : i64} {
  func.func @_gcn_stack_kernel(%arg0: memref<24x24xbf16, #tpu.memory_space<vmem>>, %arg1: memref<24x32xbf16, #tpu.memory_space<vmem>>, %arg2: memref<3x32x32xbf16, #tpu.memory_space<vmem>>, %arg3: memref<3x1x32xf32, #tpu.memory_space<vmem>>, %arg4: memref<32x128xbf16, #tpu.memory_space<vmem>>, %arg5: memref<1x128xf32, #tpu.memory_space<vmem>>, %arg6: memref<24x128xf32, #tpu.memory_space<vmem>>) attributes {dimension_semantics = [], scalar_prefetch = 0 : i64, scratch_operands = 0 : i64, tpu.core_type = #tpu.core_type<tc>} {
    %c0 = arith.constant 0 : index
    %c0_0 = arith.constant 0 : index
    %0 = vector.load %arg0[%c0, %c0_0] : memref<24x24xbf16, #tpu.memory_space<vmem>>, vector<24x24xbf16>
    %c0_1 = arith.constant 0 : index
    %c0_2 = arith.constant 0 : index
    %1 = vector.load %arg1[%c0_1, %c0_2] : memref<24x32xbf16, #tpu.memory_space<vmem>>, vector<24x32xbf16>
    %c0_3 = arith.constant 0 : index
    %c0_4 = arith.constant 0 : index
    %c0_5 = arith.constant 0 : index
    %2 = vector.load %arg2[%c0_3, %c0_4, %c0_5] : memref<3x32x32xbf16, #tpu.memory_space<vmem>>, vector<1x32x32xbf16>
    %3 = vector.shape_cast %2 : vector<1x32x32xbf16> to vector<32x32xbf16>
    %cst = arith.constant dense<0.000000e+00> : vector<24x32xf32>
    %4 = tpu.matmul %1, %3, %cst {dimension_numbers = #tpu.dot_dimension_numbers<[1], [0], [0], [1], [0, 0, 1, 1], [], []>} : vector<24x32xbf16>, vector<32x32xbf16>, vector<24x32xf32> -> vector<24x32xf32>
    %5 = arith.truncf %4 : vector<24x32xf32> to vector<24x32xbf16>
    %cst_6 = arith.constant dense<0.000000e+00> : vector<24x32xf32>
    %6 = tpu.matmul %0, %5, %cst_6 {dimension_numbers = #tpu.dot_dimension_numbers<[1], [0], [0], [1], [0, 0, 1, 1], [], []>} : vector<24x24xbf16>, vector<24x32xbf16>, vector<24x32xf32> -> vector<24x32xf32>
    %c0_7 = arith.constant 0 : index
    %c0_8 = arith.constant 0 : index
    %c0_9 = arith.constant 0 : index
    %7 = vector.load %arg3[%c0_7, %c0_8, %c0_9] : memref<3x1x32xf32, #tpu.memory_space<vmem>>, vector<1x1x32xf32>
    %8 = vector.shape_cast %7 : vector<1x1x32xf32> to vector<1x32xf32>
    %9 = vector.broadcast %8 : vector<1x32xf32> to vector<24x32xf32>
    %10 = arith.addf %6, %9 : vector<24x32xf32>
    %11 = math.tanh %10 : vector<24x32xf32>
    %12 = arith.truncf %11 : vector<24x32xf32> to vector<24x32xbf16>
    %c1 = arith.constant 1 : index
    %c0_10 = arith.constant 0 : index
    %c0_11 = arith.constant 0 : index
    %13 = vector.load %arg2[%c1, %c0_10, %c0_11] : memref<3x32x32xbf16, #tpu.memory_space<vmem>>, vector<1x32x32xbf16>
    %14 = vector.shape_cast %13 : vector<1x32x32xbf16> to vector<32x32xbf16>
    %cst_12 = arith.constant dense<0.000000e+00> : vector<24x32xf32>
    %15 = tpu.matmul %12, %14, %cst_12 {dimension_numbers = #tpu.dot_dimension_numbers<[1], [0], [0], [1], [0, 0, 1, 1], [], []>} : vector<24x32xbf16>, vector<32x32xbf16>, vector<24x32xf32> -> vector<24x32xf32>
    %16 = arith.truncf %15 : vector<24x32xf32> to vector<24x32xbf16>
    %cst_13 = arith.constant dense<0.000000e+00> : vector<24x32xf32>
    %17 = tpu.matmul %0, %16, %cst_13 {dimension_numbers = #tpu.dot_dimension_numbers<[1], [0], [0], [1], [0, 0, 1, 1], [], []>} : vector<24x24xbf16>, vector<24x32xbf16>, vector<24x32xf32> -> vector<24x32xf32>
    %c1_14 = arith.constant 1 : index
    %c0_15 = arith.constant 0 : index
    %c0_16 = arith.constant 0 : index
    %18 = vector.load %arg3[%c1_14, %c0_15, %c0_16] : memref<3x1x32xf32, #tpu.memory_space<vmem>>, vector<1x1x32xf32>
    %19 = vector.shape_cast %18 : vector<1x1x32xf32> to vector<1x32xf32>
    %20 = vector.broadcast %19 : vector<1x32xf32> to vector<24x32xf32>
    %21 = arith.addf %17, %20 : vector<24x32xf32>
    %22 = math.tanh %21 : vector<24x32xf32>
    %23 = arith.truncf %22 : vector<24x32xf32> to vector<24x32xbf16>
    %c2 = arith.constant 2 : index
    %c0_17 = arith.constant 0 : index
    %c0_18 = arith.constant 0 : index
    %24 = vector.load %arg2[%c2, %c0_17, %c0_18] : memref<3x32x32xbf16, #tpu.memory_space<vmem>>, vector<1x32x32xbf16>
    %25 = vector.shape_cast %24 : vector<1x32x32xbf16> to vector<32x32xbf16>
    %cst_19 = arith.constant dense<0.000000e+00> : vector<24x32xf32>
    %26 = tpu.matmul %23, %25, %cst_19 {dimension_numbers = #tpu.dot_dimension_numbers<[1], [0], [0], [1], [0, 0, 1, 1], [], []>} : vector<24x32xbf16>, vector<32x32xbf16>, vector<24x32xf32> -> vector<24x32xf32>
    %27 = arith.truncf %26 : vector<24x32xf32> to vector<24x32xbf16>
    %cst_20 = arith.constant dense<0.000000e+00> : vector<24x32xf32>
    %28 = tpu.matmul %0, %27, %cst_20 {dimension_numbers = #tpu.dot_dimension_numbers<[1], [0], [0], [1], [0, 0, 1, 1], [], []>} : vector<24x24xbf16>, vector<24x32xbf16>, vector<24x32xf32> -> vector<24x32xf32>
    %c2_21 = arith.constant 2 : index
    %c0_22 = arith.constant 0 : index
    %c0_23 = arith.constant 0 : index
    %29 = vector.load %arg3[%c2_21, %c0_22, %c0_23] : memref<3x1x32xf32, #tpu.memory_space<vmem>>, vector<1x1x32xf32>
    %30 = vector.shape_cast %29 : vector<1x1x32xf32> to vector<1x32xf32>
    %31 = vector.broadcast %30 : vector<1x32xf32> to vector<24x32xf32>
    %32 = arith.addf %28, %31 : vector<24x32xf32>
    %33 = math.tanh %32 : vector<24x32xf32>
    %34 = arith.truncf %33 : vector<24x32xf32> to vector<24x32xbf16>
    %c0_24 = arith.constant 0 : index
    %c0_25 = arith.constant 0 : index
    %35 = vector.load %arg4[%c0_24, %c0_25] : memref<32x128xbf16, #tpu.memory_space<vmem>>, vector<32x128xbf16>
    %cst_26 = arith.constant dense<0.000000e+00> : vector<24x128xf32>
    %36 = tpu.matmul %34, %35, %cst_26 {dimension_numbers = #tpu.dot_dimension_numbers<[1], [0], [0], [1], [0, 0, 1, 1], [], []>} : vector<24x32xbf16>, vector<32x128xbf16>, vector<24x128xf32> -> vector<24x128xf32>
    %37 = arith.truncf %36 : vector<24x128xf32> to vector<24x128xbf16>
    %cst_27 = arith.constant dense<0.000000e+00> : vector<24x128xf32>
    %38 = tpu.matmul %0, %37, %cst_27 {dimension_numbers = #tpu.dot_dimension_numbers<[1], [0], [0], [1], [0, 0, 1, 1], [], []>} : vector<24x24xbf16>, vector<24x128xbf16>, vector<24x128xf32> -> vector<24x128xf32>
    %c0_28 = arith.constant 0 : index
    %c0_29 = arith.constant 0 : index
    %39 = vector.load %arg5[%c0_28, %c0_29] : memref<1x128xf32, #tpu.memory_space<vmem>>, vector<1x128xf32>
    %40 = vector.broadcast %39 : vector<1x128xf32> to vector<24x128xf32>
    %41 = arith.addf %38, %40 : vector<24x128xf32>
    %42 = math.tanh %41 : vector<24x128xf32>
    %43 = vector.extract_strided_slice %42 {offsets = [0, 0], sizes = [24, 32], strides = [1, 1]} : vector<24x128xf32> to vector<24x32xf32>
    %44 = tpu.concatenate %11, %22, %33, %43 in 1 : vector<24x32xf32>, vector<24x32xf32>, vector<24x32xf32>, vector<24x32xf32> -> vector<24x128xf32>
    %c0_30 = arith.constant 0 : index
    %c0_31 = arith.constant 0 : index
    %45 = vector.load %arg6[%c0_30, %c0_31] : memref<24x128xf32, #tpu.memory_space<vmem>>, vector<24x128xf32>
    tpu.vector_store %arg6[%c0_30, %c0_31], %44 {strides = array<i32>} : memref<24x128xf32, #tpu.memory_space<vmem>>, vector<24x128xf32>,
    return
  }
}

module attributes {stable_mosaic.version = 11 : i64} {
  func.func @_head_kernel(%arg0: memref<20x128xbf16, #tpu.memory_space<vmem>>, %arg1: memref<128x16xbf16, #tpu.memory_space<vmem>>, %arg2: memref<1x16xf32, #tpu.memory_space<vmem>>, %arg3: memref<128x32xbf16, #tpu.memory_space<vmem>>, %arg4: memref<1x32xf32, #tpu.memory_space<vmem>>, %arg5: memref<32x128xbf16, #tpu.memory_space<vmem>>, %arg6: memref<1x128xf32, #tpu.memory_space<vmem>>, %arg7: memref<128x128xbf16, #tpu.memory_space<vmem>>, %arg8: memref<1x128xf32, #tpu.memory_space<vmem>>, %arg9: memref<2x128xf32, #tpu.memory_space<vmem>>) attributes {dimension_semantics = [], scalar_prefetch = 0 : i64, scratch_operands = 0 : i64, tpu.core_type = #tpu.core_type<tc>} {
    %c0 = arith.constant 0 : index
    %c0_0 = arith.constant 0 : index
    %0 = vector.load %arg0[%c0, %c0_0] : memref<20x128xbf16, #tpu.memory_space<vmem>>, vector<20x128xbf16>
    %c0_1 = arith.constant 0 : index
    %c0_2 = arith.constant 0 : index
    %1 = vector.load %arg1[%c0_1, %c0_2] : memref<128x16xbf16, #tpu.memory_space<vmem>>, vector<128x16xbf16>
    %cst = arith.constant dense<0.000000e+00> : vector<20x16xf32>
    %2 = tpu.matmul %0, %1, %cst {dimension_numbers = #tpu.dot_dimension_numbers<[1], [0], [0], [1], [0, 0, 1, 1], [], []>} : vector<20x128xbf16>, vector<128x16xbf16>, vector<20x16xf32> -> vector<20x16xf32>
    %c0_3 = arith.constant 0 : index
    %c0_4 = arith.constant 0 : index
    %3 = vector.load %arg2[%c0_3, %c0_4] : memref<1x16xf32, #tpu.memory_space<vmem>>, vector<1x16xf32>
    %4 = vector.broadcast %3 : vector<1x16xf32> to vector<20x16xf32>
    %5 = arith.addf %2, %4 : vector<20x16xf32>
    %cst_5 = arith.constant 0.000000e+00 : f32
    %6 = vector.broadcast %cst_5 : f32 to vector<20x16xf32>
    %7 = arith.maximumf %5, %6 : vector<20x16xf32>
    %8 = vector.extract_strided_slice %7 {offsets = [0, 0], sizes = [1, 16], strides = [1, 1]} : vector<20x16xf32> to vector<1x16xf32>
    %9 = vector.extract_strided_slice %7 {offsets = [1, 0], sizes = [1, 16], strides = [1, 1]} : vector<20x16xf32> to vector<1x16xf32>
    %10 = arith.maximumf %8, %9 : vector<1x16xf32>
    %11 = vector.extract_strided_slice %7 {offsets = [2, 0], sizes = [1, 16], strides = [1, 1]} : vector<20x16xf32> to vector<1x16xf32>
    %12 = vector.extract_strided_slice %7 {offsets = [3, 0], sizes = [1, 16], strides = [1, 1]} : vector<20x16xf32> to vector<1x16xf32>
    %13 = arith.maximumf %11, %12 : vector<1x16xf32>
    %14 = vector.extract_strided_slice %7 {offsets = [4, 0], sizes = [1, 16], strides = [1, 1]} : vector<20x16xf32> to vector<1x16xf32>
    %15 = vector.extract_strided_slice %7 {offsets = [5, 0], sizes = [1, 16], strides = [1, 1]} : vector<20x16xf32> to vector<1x16xf32>
    %16 = arith.maximumf %14, %15 : vector<1x16xf32>
    %17 = vector.extract_strided_slice %7 {offsets = [6, 0], sizes = [1, 16], strides = [1, 1]} : vector<20x16xf32> to vector<1x16xf32>
    %18 = vector.extract_strided_slice %7 {offsets = [7, 0], sizes = [1, 16], strides = [1, 1]} : vector<20x16xf32> to vector<1x16xf32>
    %19 = arith.maximumf %17, %18 : vector<1x16xf32>
    %20 = vector.extract_strided_slice %7 {offsets = [8, 0], sizes = [1, 16], strides = [1, 1]} : vector<20x16xf32> to vector<1x16xf32>
    %21 = vector.extract_strided_slice %7 {offsets = [9, 0], sizes = [1, 16], strides = [1, 1]} : vector<20x16xf32> to vector<1x16xf32>
    %22 = arith.maximumf %20, %21 : vector<1x16xf32>
    %cst_6 = arith.constant 0.000000e+00 : f32
    %23 = vector.broadcast %cst_6 : f32 to vector<1x48xf32>
    %24 = tpu.concatenate %10, %13, %16, %19, %22, %23 in 1 : vector<1x16xf32>, vector<1x16xf32>, vector<1x16xf32>, vector<1x16xf32>, vector<1x16xf32>, vector<1x48xf32> -> vector<1x128xf32>
    %25 = vector.extract_strided_slice %7 {offsets = [10, 0], sizes = [1, 16], strides = [1, 1]} : vector<20x16xf32> to vector<1x16xf32>
    %26 = vector.extract_strided_slice %7 {offsets = [11, 0], sizes = [1, 16], strides = [1, 1]} : vector<20x16xf32> to vector<1x16xf32>
    %27 = arith.maximumf %25, %26 : vector<1x16xf32>
    %28 = vector.extract_strided_slice %7 {offsets = [12, 0], sizes = [1, 16], strides = [1, 1]} : vector<20x16xf32> to vector<1x16xf32>
    %29 = vector.extract_strided_slice %7 {offsets = [13, 0], sizes = [1, 16], strides = [1, 1]} : vector<20x16xf32> to vector<1x16xf32>
    %30 = arith.maximumf %28, %29 : vector<1x16xf32>
    %31 = vector.extract_strided_slice %7 {offsets = [14, 0], sizes = [1, 16], strides = [1, 1]} : vector<20x16xf32> to vector<1x16xf32>
    %32 = vector.extract_strided_slice %7 {offsets = [15, 0], sizes = [1, 16], strides = [1, 1]} : vector<20x16xf32> to vector<1x16xf32>
    %33 = arith.maximumf %31, %32 : vector<1x16xf32>
    %34 = vector.extract_strided_slice %7 {offsets = [16, 0], sizes = [1, 16], strides = [1, 1]} : vector<20x16xf32> to vector<1x16xf32>
    %35 = vector.extract_strided_slice %7 {offsets = [17, 0], sizes = [1, 16], strides = [1, 1]} : vector<20x16xf32> to vector<1x16xf32>
    %36 = arith.maximumf %34, %35 : vector<1x16xf32>
    %37 = vector.extract_strided_slice %7 {offsets = [18, 0], sizes = [1, 16], strides = [1, 1]} : vector<20x16xf32> to vector<1x16xf32>
    %38 = vector.extract_strided_slice %7 {offsets = [19, 0], sizes = [1, 16], strides = [1, 1]} : vector<20x16xf32> to vector<1x16xf32>
    %39 = arith.maximumf %37, %38 : vector<1x16xf32>
    %cst_7 = arith.constant 0.000000e+00 : f32
    %40 = vector.broadcast %cst_7 : f32 to vector<1x48xf32>
    %41 = tpu.concatenate %27, %30, %33, %36, %39, %40 in 1 : vector<1x16xf32>, vector<1x16xf32>, vector<1x16xf32>, vector<1x16xf32>, vector<1x16xf32>, vector<1x48xf32> -> vector<1x128xf32>
    %42 = tpu.concatenate %24, %41 in 0 : vector<1x128xf32>, vector<1x128xf32> -> vector<2x128xf32>
    %43 = arith.truncf %42 : vector<2x128xf32> to vector<2x128xbf16>
    %c0_8 = arith.constant 0 : index
    %c0_9 = arith.constant 0 : index
    %44 = vector.load %arg3[%c0_8, %c0_9] : memref<128x32xbf16, #tpu.memory_space<vmem>>, vector<128x32xbf16>
    %cst_10 = arith.constant dense<0.000000e+00> : vector<2x32xf32>
    %45 = tpu.matmul %43, %44, %cst_10 {dimension_numbers = #tpu.dot_dimension_numbers<[1], [0], [0], [1], [0, 0, 1, 1], [], []>} : vector<2x128xbf16>, vector<128x32xbf16>, vector<2x32xf32> -> vector<2x32xf32>
    %c0_11 = arith.constant 0 : index
    %c0_12 = arith.constant 0 : index
    %46 = vector.load %arg4[%c0_11, %c0_12] : memref<1x32xf32, #tpu.memory_space<vmem>>, vector<1x32xf32>
    %47 = vector.broadcast %46 : vector<1x32xf32> to vector<2x32xf32>
    %48 = arith.addf %45, %47 : vector<2x32xf32>
    %cst_13 = arith.constant 0.000000e+00 : f32
    %49 = vector.broadcast %cst_13 : f32 to vector<2x32xf32>
    %50 = arith.maximumf %48, %49 : vector<2x32xf32>
    %51 = arith.truncf %50 : vector<2x32xf32> to vector<2x32xbf16>
    %c0_14 = arith.constant 0 : index
    %c0_15 = arith.constant 0 : index
    %52 = vector.load %arg5[%c0_14, %c0_15] : memref<32x128xbf16, #tpu.memory_space<vmem>>, vector<32x128xbf16>
    %cst_16 = arith.constant dense<0.000000e+00> : vector<2x128xf32>
    %53 = tpu.matmul %51, %52, %cst_16 {dimension_numbers = #tpu.dot_dimension_numbers<[1], [0], [0], [1], [0, 0, 1, 1], [], []>} : vector<2x32xbf16>, vector<32x128xbf16>, vector<2x128xf32> -> vector<2x128xf32>
    %c0_17 = arith.constant 0 : index
    %c0_18 = arith.constant 0 : index
    %54 = vector.load %arg6[%c0_17, %c0_18] : memref<1x128xf32, #tpu.memory_space<vmem>>, vector<1x128xf32>
    %55 = vector.broadcast %54 : vector<1x128xf32> to vector<2x128xf32>
    %56 = arith.addf %53, %55 : vector<2x128xf32>
    %cst_19 = arith.constant 0.000000e+00 : f32
    %57 = vector.broadcast %cst_19 : f32 to vector<2x128xf32>
    %58 = arith.maximumf %56, %57 : vector<2x128xf32>
    %59 = arith.truncf %58 : vector<2x128xf32> to vector<2x128xbf16>
    %c0_20 = arith.constant 0 : index
    %c0_21 = arith.constant 0 : index
    %60 = vector.load %arg7[%c0_20, %c0_21] : memref<128x128xbf16, #tpu.memory_space<vmem>>, vector<128x128xbf16>
    %cst_22 = arith.constant dense<0.000000e+00> : vector<2x128xf32>
    %61 = tpu.matmul %59, %60, %cst_22 {dimension_numbers = #tpu.dot_dimension_numbers<[1], [0], [0], [1], [0, 0, 1, 1], [], []>} : vector<2x128xbf16>, vector<128x128xbf16>, vector<2x128xf32> -> vector<2x128xf32>
    %c0_23 = arith.constant 0 : index
    %c0_24 = arith.constant 0 : index
    %62 = vector.load %arg8[%c0_23, %c0_24] : memref<1x128xf32, #tpu.memory_space<vmem>>, vector<1x128xf32>
    %63 = vector.broadcast %62 : vector<1x128xf32> to vector<2x128xf32>
    %64 = arith.addf %61, %63 : vector<2x128xf32>
    %c0_25 = arith.constant 0 : index
    %c0_26 = arith.constant 0 : index
    %65 = vector.load %arg9[%c0_25, %c0_26] : memref<2x128xf32, #tpu.memory_space<vmem>>, vector<2x128xf32>
    tpu.vector_store %arg9[%c0_25, %c0_26], %64 {strides = array<i32>} : memref<2x128xf32, #tpu.memory_space<vmem>>, vector<2x128xf32>,
    return
  }
}

</mosaic_0001>

<llo_original>
// kernel: dgcnn_forward.2
$region0: #{dgcnn_forward.2}
  #allocation0 [shape = 'u32[]', space=smem, size = 0x4, offset = 0x4, fixed_abs, tag = 'smem constant byte address 0x4 - core index']
  #allocation1 [shape = 'u32[144,128]{1,0:T(1,128)}', space=vmem, size = 0x12000, scoped, tag = 'internal scratch']
  %s0 = inlined_call_operand.vmem [shape: bf16[24,24], index: 0, kind: input, shape index: {}]
  %s1 = inlined_call_operand.vmem [shape: bf16[24,32], index: 1, kind: input, shape index: {}]
  %s2 = inlined_call_operand.vmem [shape: bf16[3,32,32], index: 2, kind: input, shape index: {}]
  %s3 = inlined_call_operand.vmem [shape: f32[3,1,32], index: 3, kind: input, shape index: {}]
  %s4 = inlined_call_operand.vmem [shape: bf16[32,128], index: 4, kind: input, shape index: {}]
  %s5 = inlined_call_operand.vmem [shape: f32[1,128], index: 5, kind: input, shape index: {}]
  %s6 = inlined_call_operand.vmem [shape: f32[24,128], index: 6, kind: output, shape index: {}]
  %s7 = sld [smem:[#allocation0]]
  $region34: #{dgcnn_forward.2} parent=0
    _
  %s9 = ssub.s32 1, %s7
  %s10 = scalar_select 0, %s9, %s7
  // Predicated region
  $region2: #{dgcnn_forward.2} parent=0 // pred_check
    _
  $region3: #{dgcnn_forward.2} parent=0 // pred_check_branch
    %12 = sbr.rel (0) target = $region5
  $region4: #{dgcnn_forward.2} parent=0 // pred_region
    _
  $region5: #{dgcnn_forward.2} parent=0 // pred_fallthru
    _
  // Predicated region
  $region6: #{dgcnn_forward.2} parent=0 // pred_check
    _
  $region7: #{dgcnn_forward.2} parent=0 // pred_check_branch
    %14 = sbr.rel (0) target = $region9
  $region8: #{dgcnn_forward.2} parent=0 // pred_region
    _
  $region9: #{dgcnn_forward.2} parent=0 // pred_fallthru
    _
  // Predicated region
  $region10: #{dgcnn_forward.2} parent=0 // pred_check
    _
  $region11: #{dgcnn_forward.2} parent=0 // pred_check_branch
    %16 = sbr.rel (0) target = $region13
  $region12: #{dgcnn_forward.2} parent=0 // pred_region
    _
  $region13: #{dgcnn_forward.2} parent=0 // pred_fallthru
    _
  // Predicated region
  $region14: #{dgcnn_forward.2} parent=0 // pred_check
    _
  $region15: #{dgcnn_forward.2} parent=0 // pred_check_branch
    %18 = sbr.rel (0) target = $region17
  $region16: #{dgcnn_forward.2} parent=0 // pred_region
    _
  $region17: #{dgcnn_forward.2} parent=0 // pred_fallthru
    _
  // Predicated region
  $region18: #{dgcnn_forward.2} parent=0 // pred_check
    _
  $region19: #{dgcnn_forward.2} parent=0 // pred_check_branch
    %20 = sbr.rel (0) target = $region21
  $region20: #{dgcnn_forward.2} parent=0 // pred_region
    _
  $region21: #{dgcnn_forward.2} parent=0 // pred_fallthru
    _
  // Predicated region
  $region22: #{dgcnn_forward.2} parent=0 // pred_check
    _
  $region23: #{dgcnn_forward.2} parent=0 // pred_check_branch
    %22 = sbr.rel (0) target = $region25
  $region24: #{dgcnn_forward.2} parent=0 // pred_region
    _
  $region25: #{dgcnn_forward.2} parent=0 // pred_fallthru
    _
  %v24 = vld [vmem:[%s0] sm:$0xf]
  %v25 = vld [vmem:[%s0 + $0x4] sm:$0xf]
  %v26 = vld [vmem:[%s0 + $0x8] sm:$0xf]
  %v27 = vld [vmem:[%s1] sm:$0xf]
  %v28 = vld [vmem:[%s1 + $0x4] sm:$0xf]
  %v29 = vld [vmem:[%s1 + $0x8] sm:$0xf]
  %v30 = vld [vmem:[%s2] sm:$0xf]
  %v31 = vld [vmem:[%s2 + $0x4] sm:$0xf]
  %v32 = vld [vmem:[%s2 + $0x8] sm:$0xf]
  %v33 = vld [vmem:[%s2 + $0xc] sm:$0xf]
  %v37 = vunpack.c.l.b16 %v27
  %v38 = vunpack.c.l.b16 %v28
  %v39 = vunpack.c.l.b16 %v29
  %v40 = vpack.c.b16 %v38, %v37
  %v41 = vpack.c.b16 %v39, %v39
  %v46 = vunpack.c.l.b16 %v30
  %v47 = vunpack.c.l.b16 %v31
  %v48 = vunpack.c.l.b16 %v32
  %v49 = vunpack.c.l.b16 %v33
  %v50 = vpack.c.b16 %v47, %v46
  %v51 = vpack.c.b16 %v49, %v48
  %vm54 = vcmask 261120
  %v56 = vsel %vm54, %v40, 0
  %v59 = vsel %vm54, %v41, 0
  %61 = vmatprep.subr.bf16.mxu0 0
  %62 = vmatpush1.bf16.msra.mxu0 %v50
  %63 = vmatprep.subr.bf16.mxu0 0
  %64 = vmatpush1.bf16.msra.mxu0 %v51
  %65 = vmatprep.subr.bf16.mxu0 0
  %66 = vmatpush1.bf16.msra.mxu0 0
  %67 = vmatprep.subr.bf16.mxu0 0
  %68 = vmatpush1.bf16.msra.mxu0 0
  %69 = vmatprep.subr.bf16.mxu0 0
  %70 = vmatpush1.bf16.msra.mxu0 0
  %71 = vmatprep.subr.bf16.mxu0 0
  %72 = vmatpush1.bf16.msra.mxu0 0
  %73 = vmatprep.subr.bf16.mxu0 0
  %74 = vmatpush1.bf16.msra.mxu0 0
  %75 = vmatprep.subr.bf16.mxu0 0
  %76 = vmatpush1.bf16.msra.mxu0 0
  %77 = vmatprep.subr.bf16.mxu0 0
  %78 = vmatpush1.bf16.msra.mxu0 0
  %79 = vmatprep.subr.bf16.mxu0 0
  %80 = vmatpush1.bf16.msra.mxu0 0
  %81 = vmatprep.subr.bf16.mxu0 0
  %82 = vmatpush1.bf16.msra.mxu0 0
  %83 = vmatprep.subr.bf16.mxu0 0
  %84 = vmatpush1.bf16.msra.mxu0 0
  %85 = vmatprep.subr.bf16.mxu0 0
  %86 = vmatpush1.bf16.msra.mxu0 0
  %87 = vmatprep.subr.bf16.mxu0 0
  %88 = vmatpush1.bf16.msra.mxu0 0
  %89 = vmatprep.subr.bf16.mxu0 0
  %90 = vmatpush1.bf16.msra.mxu0 0
  %91 = vmatprep.subr.bf16.mxu0 0
  %92 = vmatpush1.bf16.msra.mxu0 0
  %93 = vmatprep.mubr.bf16.mxu0 0
  %94 = vmatmul.mubr.bf16.gmra.mrb[0].mxu0 %v56
  %v95 = vpop.f32.mrb[0].mxu0
  %v96 = vadd.f32 0.0, %v95
  %v97 = vpop.f32.mrb[0].mxu0
  %v98 = vpop.f32.mrb[0].mxu0
  %v99 = vadd.f32 0.0, %v98
  %v100 = vpop.f32.mrb[0].mxu0
  %101 = vmatprep.mubr.bf16.mxu0 0
  %102 = vmatmul.mubr.bf16.gmra.mrb[0].mxu0 %v59
  %v103 = vpop.f32.mrb[0].mxu0
  %v104 = vadd.f32 0.0, %v103
  %v105 = vpop.f32.mrb[0].mxu0
  %v106 = vpop.f32.mrb[0].mxu0
  %v107 = vpop.f32.mrb[0].mxu0
  %108 = vdwg.mxu0
  %v109 = vpack.c.bf16 %v99, %v96
  %v110 = vpack.c.bf16 %v104, %v104
  %v111 = vld [vmem:[%s3] sm:$0x1]
  %v113 = vlaneseq
  %v114 = vshrl.u32 %v113, 7
  %v115 = vsub.s32 0, %v114
  %v116 = vrot.slane %v111, %v115
  %v121 = vunpack.c.l.b16 %v24
  %v122 = vunpack.c.l.b16 %v25
  %v123 = vunpack.c.l.b16 %v26
  %v124 = vpack.c.b16 %v122, %v121
  %v125 = vpack.c.b16 %v123, %v123
  %vm126 = vcmask 195584
  %v128 = vsel %vm126, %v124, 0
  %v131 = vsel %vm126, %v125, 0
  %vm133 = vcmask 1043456
  %v135 = vsel %vm133, %v110, 0
  %137 = vmatprep.subr.bf16.mxu0 0
  %138 = vmatpush1.bf16.msra.mxu0 %v109
  %139 = vmatprep.subr.bf16.mxu0 0
  %140 = vmatpush1.bf16.msra.mxu0 %v135
  %141 = vmatprep.subr.bf16.mxu0 0
  %142 = vmatpush1.bf16.msra.mxu0 0
  %143 = vmatprep.subr.bf16.mxu0 0
  %144 = vmatpush1.bf16.msra.mxu0 0
  %145 = vmatprep.subr.bf16.mxu0 0
  %146 = vmatpush1.bf16.msra.mxu0 0
  %147 = vmatprep.subr.bf16.mxu0 0
  %148 = vmatpush1.bf16.msra.mxu0 0
  %149 = vmatprep.subr.bf16.mxu0 0
  %150 = vmatpush1.bf16.msra.mxu0 0
  %151 = vmatprep.subr.bf16.mxu0 0
  %152 = vmatpush1.bf16.msra.mxu0 0
  %153 = vmatprep.subr.bf16.mxu0 0
  %154 = vmatpush1.bf16.msra.mxu0 0
  %155 = vmatprep.subr.bf16.mxu0 0
  %156 = vmatpush1.bf16.msra.mxu0 0
  %157 = vmatprep.subr.bf16.mxu0 0
  %158 = vmatpush1.bf16.msra.mxu0 0
  %159 = vmatprep.subr.bf16.mxu0 0
  %160 = vmatpush1.bf16.msra.mxu0 0
  %161 = vmatprep.subr.bf16.mxu0 0
  %162 = vmatpush1.bf16.msra.mxu0 0
  %163 = vmatprep.subr.bf16.mxu0 0
  %164 = vmatpush1.bf16.msra.mxu0 0
  %165 = vmatprep.subr.bf16.mxu0 0
  %166 = vmatpush1.bf16.msra.mxu0 0
  %167 = vmatprep.subr.bf16.mxu0 0
  %168 = vmatpush1.bf16.msra.mxu0 0
  %169 = vmatprep.mubr.bf16.mxu0 0
  %170 = vmatmul.mubr.bf16.gmra.mrb[0].mxu0 %v128
  %v171 = vpop.f32.mrb[0].mxu0
  %v172 = vadd.f32 %v116, %v171
  %v173 = vpop.f32.mrb[0].mxu0
  %v174 = vpop.f32.mrb[0].mxu0
  %v175 = vadd.f32 %v116, %v174
  %v176 = vpop.f32.mrb[0].mxu0
  %177 = vmatprep.mubr.bf16.mxu0 0
  %178 = vmatmul.mubr.bf16.gmra.mrb[0].mxu0 %v131
  %v179 = vpop.f32.mrb[0].mxu0
  %v180 = vadd.f32 %v116, %v179
  %v181 = vpop.f32.mrb[0].mxu0
  %v182 = vpop.f32.mrb[0].mxu0
  %v183 = vpop.f32.mrb[0].mxu0
  %184 = vdwg.mxu0
  %v185 = vtanh.pop %v172
  %v186 = vtanh.pop %v175
  %v187 = vtanh.pop %v180
  %v188 = vpack.c.bf16 %v186, %v185
  %v189 = vpack.c.bf16 %v187, %v187
  %s190 = scalar_lea.vmem %s2, 16
  %v191 = vld [vmem:[%s190] sm:$0xf]
  %v192 = vld [vmem:[%s190 + $0x4] sm:$0xf]
  %v193 = vld [vmem:[%s190 + $0x8] sm:$0xf]
  %v194 = vld [vmem:[%s190 + $0xc] sm:$0xf]
  %v199 = vunpack.c.l.b16 %v191
  %v200 = vunpack.c.l.b16 %v192
  %v201 = vunpack.c.l.b16 %v193
  %v202 = vunpack.c.l.b16 %v194
  %v203 = vpack.c.b16 %v200, %v199
  %v204 = vpack.c.b16 %v202, %v201
  %v208 = vsel %vm54, %v188, 0
  %v211 = vsel %vm54, %v189, 0
  %213 = vmatprep.subr.bf16.mxu0 0
  %214 = vmatpush1.bf16.msra.mxu0 %v203
  %215 = vmatprep.subr.bf16.mxu0 0
  %216 = vmatpush1.bf16.msra.mxu0 %v204
  %217 = vmatprep.subr.bf16.mxu0 0
  %218 = vmatpush1.bf16.msra.mxu0 0
  %219 = vmatprep.subr.bf16.mxu0 0
  %220 = vmatpush1.bf16.msra.mxu0 0
  %221 = vmatprep.subr.bf16.mxu0 0
  %222 = vmatpush1.bf16.msra.mxu0 0
  %223 = vmatprep.subr.bf16.mxu0 0
  %224 = vmatpush1.bf16.msra.mxu0 0
  %225 = vmatprep.subr.bf16.mxu0 0
  %226 = vmatpush1.bf16.msra.mxu0 0
  %227 = vmatprep.subr.bf16.mxu0 0
  %228 = vmatpush1.bf16.msra.mxu0 0
  %229 = vmatprep.subr.bf16.mxu0 0
  %230 = vmatpush1.bf16.msra.mxu0 0
  %231 = vmatprep.subr.bf16.mxu0 0
  %232 = vmatpush1.bf16.msra.mxu0 0
  %233 = vmatprep.subr.bf16.mxu0 0
  %234 = vmatpush1.bf16.msra.mxu0 0
  %235 = vmatprep.subr.bf16.mxu0 0
  %236 = vmatpush1.bf16.msra.mxu0 0
  %237 = vmatprep.subr.bf16.mxu0 0
  %238 = vmatpush1.bf16.msra.mxu0 0
  %239 = vmatprep.subr.bf16.mxu0 0
  %240 = vmatpush1.bf16.msra.mxu0 0
  %241 = vmatprep.subr.bf16.mxu0 0
  %242 = vmatpush1.bf16.msra.mxu0 0
  %243 = vmatprep.subr.bf16.mxu0 0
  %244 = vmatpush1.bf16.msra.mxu0 0
  %245 = vmatprep.mubr.bf16.mxu0 0
  %246 = vmatmul.mubr.bf16.gmra.mrb[0].mxu0 %v208
  %v247 = vpop.f32.mrb[0].mxu0
  %v248 = vadd.f32 0.0, %v247
  %v249 = vpop.f32.mrb[0].mxu0
  %v250 = vpop.f32.mrb[0].mxu0
  %v251 = vadd.f32 0.0, %v250
  %v252 = vpop.f32.mrb[0].mxu0
  %253 = vmatprep.mubr.bf16.mxu0 0
  %254 = vmatmul.mubr.bf16.gmra.mrb[0].mxu0 %v211
  %v255 = vpop.f32.mrb[0].mxu0
  %v256 = vadd.f32 0.0, %v255
  %v257 = vpop.f32.mrb[0].mxu0
  %v258 = vpop.f32.mrb[0].mxu0
  %v259 = vpop.f32.mrb[0].mxu0
  %260 = vdwg.mxu0
  %v261 = vpack.c.bf16 %v251, %v248
  %v262 = vpack.c.bf16 %v256, %v256
  %s263 = scalar_lea.vmem %s3, 1
  %v264 = vld [vmem:[%s263] sm:$0x1]
  %v266 = vlaneseq
  %v267 = vshrl.u32 %v266, 7
  %v268 = vsub.s32 0, %v267
  %v269 = vrot.slane %v264, %v268
  %v272 = vsel %vm133, %v262, 0
  %274 = vmatprep.subr.bf16.mxu0 0
  %275 = vmatpush1.bf16.msra.mxu0 %v261
  %276 = vmatprep.subr.bf16.mxu0 0
  %277 = vmatpush1.bf16.msra.mxu0 %v272
  %278 = vmatprep.subr.bf16.mxu0 0
  %279 = vmatpush1.bf16.msra.mxu0 0
  %280 = vmatprep.subr.bf16.mxu0 0
  %281 = vmatpush1.bf16.msra.mxu0 0
  %282 = vmatprep.subr.bf16.mxu0 0
  %283 = vmatpush1.bf16.msra.mxu0 0
  %284 = vmatprep.subr.bf16.mxu0 0
  %285 = vmatpush1.bf16.msra.mxu0 0
  %286 = vmatprep.subr.bf16.mxu0 0
  %287 = vmatpush1.bf16.msra.mxu0 0
  %288 = vmatprep.subr.bf16.mxu0 0
  %289 = vmatpush1.bf16.msra.mxu0 0
  %290 = vmatprep.subr.bf16.mxu0 0
  %291 = vmatpush1.bf16.msra.mxu0 0
  %292 = vmatprep.subr.bf16.mxu0 0
  %293 = vmatpush1.bf16.msra.mxu0 0
  %294 = vmatprep.subr.bf16.mxu0 0
  %295 = vmatpush1.bf16.msra.mxu0 0
  %296 = vmatprep.subr.bf16.mxu0 0
  %297 = vmatpush1.bf16.msra.mxu0 0
  %298 = vmatprep.subr.bf16.mxu0 0
  %299 = vmatpush1.bf16.msra.mxu0 0
  %300 = vmatprep.subr.bf16.mxu0 0
  %301 = vmatpush1.bf16.msra.mxu0 0
  %302 = vmatprep.subr.bf16.mxu0 0
  %303 = vmatpush1.bf16.msra.mxu0 0
  %304 = vmatprep.subr.bf16.mxu0 0
  %305 = vmatpush1.bf16.msra.mxu0 0
  %306 = vmatprep.mubr.bf16.mxu0 0
  %307 = vmatmul.mubr.bf16.gmra.mrb[0].mxu0 %v128
  %v308 = vpop.f32.mrb[0].mxu0
  %v309 = vadd.f32 %v269, %v308
  %v310 = vpop.f32.mrb[0].mxu0
  %v311 = vpop.f32.mrb[0].mxu0
  %v312 = vadd.f32 %v269, %v311
  %v313 = vpop.f32.mrb[0].mxu0
  %314 = vmatprep.mubr.bf16.mxu0 0
  %315 = vmatmul.mubr.bf16.gmra.mrb[0].mxu0 %v131
  %v316 = vpop.f32.mrb[0].mxu0
  %v317 = vadd.f32 %v269, %v316
  %v318 = vpop.f32.mrb[0].mxu0
  %v319 = vpop.f32.mrb[0].mxu0
  %v320 = vpop.f32.mrb[0].mxu0
  %321 = vdwg.mxu0
  %v322 = vtanh.pop %v309
  %v323 = vtanh.pop %v312
  %v324 = vtanh.pop %v317
  %v325 = vpack.c.bf16 %v323, %v322
  %v326 = vpack.c.bf16 %v324, %v324
  %s327 = scalar_lea.vmem %s2, 32
  %v328 = vld [vmem:[%s327] sm:$0xf]
  %v329 = vld [vmem:[%s327 + $0x4] sm:$0xf]
  %v330 = vld [vmem:[%s327 + $0x8] sm:$0xf]
  %v331 = vld [vmem:[%s327 + $0xc] sm:$0xf]
  %v336 = vunpack.c.l.b16 %v328
  %v337 = vunpack.c.l.b16 %v329
  %v338 = vunpack.c.l.b16 %v330
  %v339 = vunpack.c.l.b16 %v331
  %v340 = vpack.c.b16 %v337, %v336
  %v341 = vpack.c.b16 %v339, %v338
  %v345 = vsel %vm54, %v325, 0
  %v348 = vsel %vm54, %v326, 0
  %350 = vmatprep.subr.bf16.mxu0 0
  %351 = vmatpush1.bf16.msra.mxu0 %v340
  %352 = vmatprep.subr.bf16.mxu0 0
  %353 = vmatpush1.bf16.msra.mxu0 %v341
  %354 = vmatprep.subr.bf16.mxu0 0
  %355 = vmatpush1.bf16.msra.mxu0 0
  %356 = vmatprep.subr.bf16.mxu0 0
  %357 = vmatpush1.bf16.msra.mxu0 0
  %358 = vmatprep.subr.bf16.mxu0 0
  %359 = vmatpush1.bf16.msra.mxu0 0
  %360 = vmatprep.subr.bf16.mxu0 0
  %361 = vmatpush1.bf16.msra.mxu0 0
  %362 = vmatprep.subr.bf16.mxu0 0
  %363 = vmatpush1.bf16.msra.mxu0 0
  %364 = vmatprep.subr.bf16.mxu0 0
  %365 = vmatpush1.bf16.msra.mxu0 0
  %366 = vmatprep.subr.bf16.mxu0 0
  %367 = vmatpush1.bf16.msra.mxu0 0
  %368 = vmatprep.subr.bf16.mxu0 0
  %369 = vmatpush1.bf16.msra.mxu0 0
  %370 = vmatprep.subr.bf16.mxu0 0
  %371 = vmatpush1.bf16.msra.mxu0 0
  %372 = vmatprep.subr.bf16.mxu0 0
  %373 = vmatpush1.bf16.msra.mxu0 0
  %374 = vmatprep.subr.bf16.mxu0 0
  %375 = vmatpush1.bf16.msra.mxu0 0
  %376 = vmatprep.subr.bf16.mxu0 0
  %377 = vmatpush1.bf16.msra.mxu0 0
  %378 = vmatprep.subr.bf16.mxu0 0
  %379 = vmatpush1.bf16.msra.mxu0 0
  %380 = vmatprep.subr.bf16.mxu0 0
  %381 = vmatpush1.bf16.msra.mxu0 0
  %382 = vmatprep.mubr.bf16.mxu0 0
  %383 = vmatmul.mubr.bf16.gmra.mrb[0].mxu0 %v345
  %v384 = vpop.f32.mrb[0].mxu0
  %v385 = vadd.f32 0.0, %v384
  %v386 = vpop.f32.mrb[0].mxu0
  %v387 = vpop.f32.mrb[0].mxu0
  %v388 = vadd.f32 0.0, %v387
  %v389 = vpop.f32.mrb[0].mxu0
  %390 = vmatprep.mubr.bf16.mxu0 0
  %391 = vmatmul.mubr.bf16.gmra.mrb[0].mxu0 %v348
  %v392 = vpop.f32.mrb[0].mxu0
  %v393 = vadd.f32 0.0, %v392
  %v394 = vpop.f32.mrb[0].mxu0
  %v395 = vpop.f32.mrb[0].mxu0
  %v396 = vpop.f32.mrb[0].mxu0
  %397 = vdwg.mxu0
  %v398 = vpack.c.bf16 %v388, %v385
  %v399 = vpack.c.bf16 %v393, %v393
  %s400 = scalar_lea.vmem %s3, 2
  %v401 = vld [vmem:[%s400] sm:$0x1]
  %v403 = vlaneseq
  %v404 = vshrl.u32 %v403, 7
  %v405 = vsub.s32 0, %v404
  %v406 = vrot.slane %v401, %v405
  %v409 = vsel %vm133, %v399, 0
  %411 = vmatprep.subr.bf16.mxu0 0
  %412 = vmatpush1.bf16.msra.mxu0 %v398
  %413 = vmatprep.subr.bf16.mxu0 0
  %414 = vmatpush1.bf16.msra.mxu0 %v409
  %415 = vmatprep.subr.bf16.mxu0 0
  %416 = vmatpush1.bf16.msra.mxu0 0
  %417 = vmatprep.subr.bf16.mxu0 0
  %418 = vmatpush1.bf16.msra.mxu0 0
  %419 = vmatprep.subr.bf16.mxu0 0
  %420 = vmatpush1.bf16.msra.mxu0 0
  %421 = vmatprep.subr.bf16.mxu0 0
  %422 = vmatpush1.bf16.msra.mxu0 0
  %423 = vmatprep.subr.bf16.mxu0 0
  %424 = vmatpush1.bf16.msra.mxu0 0
  %425 = vmatprep.subr.bf16.mxu0 0
  %426 = vmatpush1.bf16.msra.mxu0 0
  %427 = vmatprep.subr.bf16.mxu0 0
  %428 = vmatpush1.bf16.msra.mxu0 0
  %429 = vmatprep.subr.bf16.mxu0 0
  %430 = vmatpush1.bf16.msra.mxu0 0
  %431 = vmatprep.subr.bf16.mxu0 0
  %432 = vmatpush1.bf16.msra.mxu0 0
  %433 = vmatprep.subr.bf16.mxu0 0
  %434 = vmatpush1.bf16.msra.mxu0 0
  %435 = vmatprep.subr.bf16.mxu0 0
  %436 = vmatpush1.bf16.msra.mxu0 0
  %437 = vmatprep.subr.bf16.mxu0 0
  %438 = vmatpush1.bf16.msra.mxu0 0
  %439 = vmatprep.subr.bf16.mxu0 0
  %440 = vmatpush1.bf16.msra.mxu0 0
  %441 = vmatprep.subr.bf16.mxu0 0
  %442 = vmatpush1.bf16.msra.mxu0 0
  %443 = vmatprep.mubr.bf16.mxu0 0
  %444 = vmatmul.mubr.bf16.gmra.mrb[0].mxu0 %v128
  %v445 = vpop.f32.mrb[0].mxu0
  %v446 = vadd.f32 %v406, %v445
  %v447 = vpop.f32.mrb[0].mxu0
  %v448 = vpop.f32.mrb[0].mxu0
  %v449 = vadd.f32 %v406, %v448
  %v450 = vpop.f32.mrb[0].mxu0
  %451 = vmatprep.mubr.bf16.mxu0 0
  %452 = vmatmul.mubr.bf16.gmra.mrb[0].mxu0 %v131
  %v453 = vpop.f32.mrb[0].mxu0
  %v454 = vadd.f32 %v406, %v453
  %v455 = vpop.f32.mrb[0].mxu0
  %v456 = vpop.f32.mrb[0].mxu0
  %v457 = vpop.f32.mrb[0].mxu0
  %458 = vdwg.mxu0
  %v459 = vtanh.pop %v446
  %v460 = vtanh.pop %v449
  %v461 = vtanh.pop %v454
  %v462 = vpack.c.bf16 %v460, %v459
  %v463 = vpack.c.bf16 %v461, %v461
  %v464 = vld [vmem:[%s4] sm:$0xf]
  %v465 = vld [vmem:[%s4 + $0x4] sm:$0xf]
  %v466 = vld [vmem:[%s4 + $0x8] sm:$0xf]
  %v467 = vld [vmem:[%s4 + $0xc] sm:$0xf]
  %v472 = vunpack.c.l.b16 %v464
  %v473 = vunpack.c.l.b16 %v465
  %v474 = vunpack.c.l.b16 %v466
  %v475 = vunpack.c.l.b16 %v467
  %v476 = vpack.c.b16 %v473, %v472
  %v477 = vpack.c.b16 %v475, %v474
  %v481 = vsel %vm54, %v462, 0
  %v484 = vsel %vm54, %v463, 0
  %486 = vmatprep.subr.bf16.mxu0 0
  %487 = vmatpush1.bf16.msra.mxu0 %v476
  %488 = vmatprep.subr.bf16.mxu0 0
  %489 = vmatpush1.bf16.msra.mxu0 %v477
  %490 = vmatprep.subr.bf16.mxu0 0
  %491 = vmatpush1.bf16.msra.mxu0 0
  %492 = vmatprep.subr.bf16.mxu0 0
  %493 = vmatpush1.bf16.msra.mxu0 0
  %494 = vmatprep.subr.bf16.mxu0 0
  %495 = vmatpush1.bf16.msra.mxu0 0
  %496 = vmatprep.subr.bf16.mxu0 0
  %497 = vmatpush1.bf16.msra.mxu0 0
  %498 = vmatprep.subr.bf16.mxu0 0
  %499 = vmatpush1.bf16.msra.mxu0 0
  %500 = vmatprep.subr.bf16.mxu0 0
  %501 = vmatpush1.bf16.msra.mxu0 0
  %502 = vmatprep.subr.bf16.mxu0 0
  %503 = vmatpush1.bf16.msra.mxu0 0
  %504 = vmatprep.subr.bf16.mxu0 0
  %505 = vmatpush1.bf16.msra.mxu0 0
  %506 = vmatprep.subr.bf16.mxu0 0
  %507 = vmatpush1.bf16.msra.mxu0 0
  %508 = vmatprep.subr.bf16.mxu0 0
  %509 = vmatpush1.bf16.msra.mxu0 0
  %510 = vmatprep.subr.bf16.mxu0 0
  %511 = vmatpush1.bf16.msra.mxu0 0
  %512 = vmatprep.subr.bf16.mxu0 0
  %513 = vmatpush1.bf16.msra.mxu0 0
  %514 = vmatprep.subr.bf16.mxu0 0
  %515 = vmatpush1.bf16.msra.mxu0 0
  %516 = vmatprep.subr.bf16.mxu0 0
  %517 = vmatpush1.bf16.msra.mxu0 0
  %518 = vmatprep.mubr.bf16.mxu0 0
  %519 = vmatmul.mubr.bf16.gmra.mrb[0].mxu0 %v481
  %v520 = vpop.f32.mrb[0].mxu0
  %v521 = vadd.f32 0.0, %v520
  %v522 = vpop.f32.mrb[0].mxu0
  %v523 = vpop.f32.mrb[0].mxu0
  %v524 = vadd.f32 0.0, %v523
  %v525 = vpop.f32.mrb[0].mxu0
  %526 = vmatprep.mubr.bf16.mxu0 0
  %527 = vmatmul.mubr.bf16.gmra.mrb[0].mxu0 %v484
  %v528 = vpop.f32.mrb[0].mxu0
  %v529 = vadd.f32 0.0, %v528
  %v530 = vpop.f32.mrb[0].mxu0
  %v531 = vpop.f32.mrb[0].mxu0
  %v532 = vpop.f32.mrb[0].mxu0
  %533 = vdwg.mxu0
  %v534 = vpack.c.bf16 %v524, %v521
  %v535 = vpack.c.bf16 %v529, %v529
  %v536 = vld [vmem:[%s5] sm:$0x1]
  %v538 = vlaneseq
  %v539 = vshrl.u32 %v538, 7
  %v540 = vsub.s32 0, %v539
  %v541 = vrot.slane %v536, %v540
  %v544 = vsel %vm133, %v535, 0
  %546 = vmatprep.subr.bf16.mxu0 0
  %547 = vmatpush1.bf16.msra.mxu0 %v534
  %548 = vmatprep.subr.bf16.mxu0 0
  %549 = vmatpush1.bf16.msra.mxu0 %v544
  %550 = vmatprep.subr.bf16.mxu0 0
  %551 = vmatpush1.bf16.msra.mxu0 0
  %552 = vmatprep.subr.bf16.mxu0 0
  %553 = vmatpush1.bf16.msra.mxu0 0
  %554 = vmatprep.subr.bf16.mxu0 0
  %555 = vmatpush1.bf16.msra.mxu0 0
  %556 = vmatprep.subr.bf16.mxu0 0
  %557 = vmatpush1.bf16.msra.mxu0 0
  %558 = vmatprep.subr.bf16.mxu0 0
  %559 = vmatpush1.bf16.msra.mxu0 0
  %560 = vmatprep.subr.bf16.mxu0 0
  %561 = vmatpush1.bf16.msra.mxu0 0
  %562 = vmatprep.subr.bf16.mxu0 0
  %563 = vmatpush1.bf16.msra.mxu0 0
  %564 = vmatprep.subr.bf16.mxu0 0
  %565 = vmatpush1.bf16.msra.mxu0 0
  %566 = vmatprep.subr.bf16.mxu0 0
  %567 = vmatpush1.bf16.msra.mxu0 0
  %568 = vmatprep.subr.bf16.mxu0 0
  %569 = vmatpush1.bf16.msra.mxu0 0
  %570 = vmatprep.subr.bf16.mxu0 0
  %571 = vmatpush1.bf16.msra.mxu0 0
  %572 = vmatprep.subr.bf16.mxu0 0
  %573 = vmatpush1.bf16.msra.mxu0 0
  %574 = vmatprep.subr.bf16.mxu0 0
  %575 = vmatpush1.bf16.msra.mxu0 0
  %576 = vmatprep.subr.bf16.mxu0 0
  %577 = vmatpush1.bf16.msra.mxu0 0
  %578 = vmatprep.mubr.bf16.mxu0 0
  %579 = vmatmul.mubr.bf16.gmra.mrb[0].mxu0 %v128
  %v580 = vpop.f32.mrb[0].mxu0
  %v581 = vadd.f32 %v541, %v580
  %v582 = vpop.f32.mrb[0].mxu0
  %v583 = vpop.f32.mrb[0].mxu0
  %v584 = vadd.f32 %v541, %v583
  %v585 = vpop.f32.mrb[0].mxu0
  %586 = vmatprep.mubr.bf16.mxu0 0
  %587 = vmatmul.mubr.bf16.gmra.mrb[0].mxu0 %v131
  %v588 = vpop.f32.mrb[0].mxu0
  %v589 = vadd.f32 %v541, %v588
  %v590 = vpop.f32.mrb[0].mxu0
  %v591 = vpop.f32.mrb[0].mxu0
  %v592 = vpop.f32.mrb[0].mxu0
  %593 = vdwg.mxu0
  %v594 = vtanh.pop %v581
  %v595 = vtanh.pop %v584
  %v596 = vtanh.pop %v589
  %600 = vrot.lane.b32.xlu0 %v322, 32
  %v601 = vpop.permute.xlu0 %600
  %602 = vrot.lane.b32.xlu0 %v323, 32
  %v603 = vpop.permute.xlu0 %602
  %604 = vrot.lane.b32.xlu0 %v324, 32
  %v605 = vpop.permute.xlu0 %604
  %612 = vrot.lane.b32.xlu0 %v459, 64
  %v613 = vpop.permute.xlu0 %612
  %614 = vrot.lane.b32.xlu0 %v460, 64
  %v615 = vpop.permute.xlu0 %614
  %616 = vrot.lane.b32.xlu0 %v461, 64
  %v617 = vpop.permute.xlu0 %616
  %624 = vrot.lane.b32.xlu0 %v594, 96
  %v625 = vpop.permute.xlu0 %624
  %626 = vrot.lane.b32.xlu0 %v595, 96
  %v627 = vpop.permute.xlu0 %626
  %628 = vrot.lane.b32.xlu0 %v596, 96
  %v629 = vpop.permute.xlu0 %628
  %v633 = vsel %vm54, %v185, %v601
  %v634 = vsel %vm54, %v186, %v603
  %v635 = vsel %vm54, %v187, %v605
  %vm636 = vcmask 523264
  %v637 = vsel %vm636, %v633, %v613
  %v638 = vsel %vm636, %v634, %v615
  %v639 = vsel %vm636, %v635, %v617
  %vm640 = vcmask 785408
  %v641 = vsel %vm640, %v637, %v625
  %v642 = vsel %vm640, %v638, %v627
  %v643 = vsel %vm640, %v639, %v629
  %644 = vst [vmem:[%s6] sm:$0xff] %v641
  %645 = vst [vmem:[%s6 + $0x8] sm:$0xff] %v642
  %646 = vst [vmem:[%s6 + $0x10] sm:$0xff] %v643
  // Predicated region
  $region26: #{dgcnn_forward.2} parent=0 // pred_check
    _
  $region27: #{dgcnn_forward.2} parent=0 // pred_check_branch
    %648 = sbr.rel (0) target = $region29
  $region28: #{dgcnn_forward.2} parent=0 // pred_region
    _
  $region29: #{dgcnn_forward.2} parent=0 // pred_fallthru
    _
  // Predicated region
  $region30: #{dgcnn_forward.2} parent=0 // pred_check
    _
  $region31: #{dgcnn_forward.2} parent=0 // pred_check_branch
    %650 = sbr.rel (0) target = $region33
  $region32: #{dgcnn_forward.2} parent=0 // pred_region
    _
  $region33: #{dgcnn_forward.2} parent=0 // pred_fallthru
    _

// kernel: dgcnn_forward.3
$region0: #{dgcnn_forward.3}
  #allocation0 [shape = 'u32[]', space=smem, size = 0x4, offset = 0x4, fixed_abs, tag = 'smem constant byte address 0x4 - core index']
  #allocation1 [shape = 'u32[144,128]{1,0:T(1,128)}', space=vmem, size = 0x12000, scoped, tag = 'internal scratch']
  %s0 = inlined_call_operand.vmem [shape: bf16[20,128], index: 0, kind: input, shape index: {}]
  %s1 = inlined_call_operand.vmem [shape: bf16[128,16], index: 1, kind: input, shape index: {}]
  %s2 = inlined_call_operand.vmem [shape: f32[1,16], index: 2, kind: input, shape index: {}]
  %s3 = inlined_call_operand.vmem [shape: bf16[128,32], index: 3, kind: input, shape index: {}]
  %s4 = inlined_call_operand.vmem [shape: f32[1,32], index: 4, kind: input, shape index: {}]
  %s5 = inlined_call_operand.vmem [shape: bf16[32,128], index: 5, kind: input, shape index: {}]
  %s6 = inlined_call_operand.vmem [shape: f32[1,128], index: 6, kind: input, shape index: {}]
  %s7 = inlined_call_operand.vmem [shape: bf16[128,128], index: 7, kind: input, shape index: {}]
  %s8 = inlined_call_operand.vmem [shape: f32[1,128], index: 8, kind: input, shape index: {}]
  %s9 = inlined_call_operand.vmem [shape: f32[2,128], index: 9, kind: output, shape index: {}]
  %s10 = sld [smem:[#allocation0]]
  $region46: #{dgcnn_forward.3} parent=0
    _
  %s12 = ssub.s32 1, %s10
  %s13 = scalar_select 0, %s12, %s10
  // Predicated region
  $region2: #{dgcnn_forward.3} parent=0 // pred_check
    _
  $region3: #{dgcnn_forward.3} parent=0 // pred_check_branch
    %15 = sbr.rel (0) target = $region5
  $region4: #{dgcnn_forward.3} parent=0 // pred_region
    _
  $region5: #{dgcnn_forward.3} parent=0 // pred_fallthru
    _
  // Predicated region
  $region6: #{dgcnn_forward.3} parent=0 // pred_check
    _
  $region7: #{dgcnn_forward.3} parent=0 // pred_check_branch
    %17 = sbr.rel (0) target = $region9
  $region8: #{dgcnn_forward.3} parent=0 // pred_region
    _
  $region9: #{dgcnn_forward.3} parent=0 // pred_fallthru
    _
  // Predicated region
  $region10: #{dgcnn_forward.3} parent=0 // pred_check
    _
  $region11: #{dgcnn_forward.3} parent=0 // pred_check_branch
    %19 = sbr.rel (0) target = $region13
  $region12: #{dgcnn_forward.3} parent=0 // pred_region
    _
  $region13: #{dgcnn_forward.3} parent=0 // pred_fallthru
    _
  // Predicated region
  $region14: #{dgcnn_forward.3} parent=0 // pred_check
    _
  $region15: #{dgcnn_forward.3} parent=0 // pred_check_branch
    %21 = sbr.rel (0) target = $region17
  $region16: #{dgcnn_forward.3} parent=0 // pred_region
    _
  $region17: #{dgcnn_forward.3} parent=0 // pred_fallthru
    _
  // Predicated region
  $region18: #{dgcnn_forward.3} parent=0 // pred_check
    _
  $region19: #{dgcnn_forward.3} parent=0 // pred_check_branch
    %23 = sbr.rel (0) target = $region21
  $region20: #{dgcnn_forward.3} parent=0 // pred_region
    _
  $region21: #{dgcnn_forward.3} parent=0 // pred_fallthru
    _
  // Predicated region
  $region22: #{dgcnn_forward.3} parent=0 // pred_check
    _
  $region23: #{dgcnn_forward.3} parent=0 // pred_check_branch
    %25 = sbr.rel (0) target = $region25
  $region24: #{dgcnn_forward.3} parent=0 // pred_region
    _
  $region25: #{dgcnn_forward.3} parent=0 // pred_fallthru
    _
  // Predicated region
  $region26: #{dgcnn_forward.3} parent=0 // pred_check
    _
  $region27: #{dgcnn_forward.3} parent=0 // pred_check_branch
    %27 = sbr.rel (0) target = $region29
  $region28: #{dgcnn_forward.3} parent=0 // pred_region
    _
  $region29: #{dgcnn_forward.3} parent=0 // pred_fallthru
    _
  // Predicated region
  $region30: #{dgcnn_forward.3} parent=0 // pred_check
    _
  $region31: #{dgcnn_forward.3} parent=0 // pred_check_branch
    %29 = sbr.rel (0) target = $region33
  $region32: #{dgcnn_forward.3} parent=0 // pred_region
    _
  $region33: #{dgcnn_forward.3} parent=0 // pred_fallthru
    _
  // Predicated region
  $region34: #{dgcnn_forward.3} parent=0 // pred_check
    _
  $region35: #{dgcnn_forward.3} parent=0 // pred_check_branch
    %31 = sbr.rel (0) target = $region37
  $region36: #{dgcnn_forward.3} parent=0 // pred_region
    _
  $region37: #{dgcnn_forward.3} parent=0 // pred_fallthru
    _
  %v33 = vld [vmem:[%s0] sm:$0xf]
  %v34 = vld [vmem:[%s0 + $0x4] sm:$0xf]
  %v35 = vld [vmem:[%s0 + $0x8] sm:$0x3]
  %v36 = vld [vmem:[%s1] sm:$0xf]
  %v37 = vld [vmem:[%s1 + $0x4] sm:$0xf]
  %v38 = vld [vmem:[%s1 + $0x8] sm:$0xf]
  %v39 = vld [vmem:[%s1 + $0xc] sm:$0xf]
  %v40 = vld [vmem:[%s1 + $0x10] sm:$0xf]
  %v41 = vld [vmem:[%s1 + $0x14] sm:$0xf]
  %v42 = vld [vmem:[%s1 + $0x18] sm:$0xf]
  %v43 = vld [vmem:[%s1 + $0x1c] sm:$0xf]
  %v44 = vld [vmem:[%s1 + $0x20] sm:$0xf]
  %v45 = vld [vmem:[%s1 + $0x24] sm:$0xf]
  %v46 = vld [vmem:[%s1 + $0x28] sm:$0xf]
  %v47 = vld [vmem:[%s1 + $0x2c] sm:$0xf]
  %v48 = vld [vmem:[%s1 + $0x30] sm:$0xf]
  %v49 = vld [vmem:[%s1 + $0x34] sm:$0xf]
  %v50 = vld [vmem:[%s1 + $0x38] sm:$0xf]
  %v51 = vld [vmem:[%s1 + $0x3c] sm:$0xf]
  %v52 = vld [vmem:[%s2] sm:$0x1]
  %v54 = vlaneseq
  %v55 = vshrl.u32 %v54, 7
  %v56 = vsub.s32 0, %v55
  %v57 = vrot.slane %v52, %v56
  %v62 = vunpack.c.l.b16 %v33
  %v63 = vunpack.c.l.b16 %v34
  %v64 = vunpack.c.l.b16 %v35
  %v65 = vpack.c.b16 %v63, %v62
  %v66 = vpack.c.b16 %v64, %v64
  %v85 = vunpack.c.l.b16 %v36
  %v86 = vunpack.c.l.b16 %v37
  %v87 = vunpack.c.l.b16 %v38
  %v88 = vunpack.c.l.b16 %v39
  %v89 = vunpack.c.l.b16 %v40
  %v90 = vunpack.c.l.b16 %v41
  %v91 = vunpack.c.l.b16 %v42
  %v92 = vunpack.c.l.b16 %v43
  %v93 = vunpack.c.l.b16 %v44
  %v94 = vunpack.c.l.b16 %v45
  %v95 = vunpack.c.l.b16 %v46
  %v96 = vunpack.c.l.b16 %v47
  %v97 = vunpack.c.l.b16 %v48
  %v98 = vunpack.c.l.b16 %v49
  %v99 = vunpack.c.l.b16 %v50
  %v100 = vunpack.c.l.b16 %v51
  %v101 = vpack.c.b16 %v86, %v85
  %v102 = vpack.c.b16 %v88, %v87
  %v103 = vpack.c.b16 %v90, %v89
  %v104 = vpack.c.b16 %v92, %v91
  %v105 = vpack.c.b16 %v94, %v93
  %v106 = vpack.c.b16 %v96, %v95
  %v107 = vpack.c.b16 %v98, %v97
  %v108 = vpack.c.b16 %v100, %v99
  %117 = vmatprep.subr.bf16.mxu0 0
  %118 = vmatpush1.bf16.msra.mxu0 %v101
  %119 = vmatprep.subr.bf16.mxu0 0
  %120 = vmatpush1.bf16.msra.mxu0 %v102
  %121 = vmatprep.subr.bf16.mxu0 0
  %122 = vmatpush1.bf16.msra.mxu0 %v103
  %123 = vmatprep.subr.bf16.mxu0 0
  %124 = vmatpush1.bf16.msra.mxu0 %v104
  %125 = vmatprep.subr.bf16.mxu0 0
  %126 = vmatpush1.bf16.msra.mxu0 %v105
  %127 = vmatprep.subr.bf16.mxu0 0
  %128 = vmatpush1.bf16.msra.mxu0 %v106
  %129 = vmatprep.subr.bf16.mxu0 0
  %130 = vmatpush1.bf16.msra.mxu0 %v107
  %131 = vmatprep.subr.bf16.mxu0 0
  %132 = vmatpush1.bf16.msra.mxu0 %v108
  %133 = vmatprep.subr.bf16.mxu0 0
  %134 = vmatpush1.bf16.msra.mxu0 0
  %135 = vmatprep.subr.bf16.mxu0 0
  %136 = vmatpush1.bf16.msra.mxu0 0
  %137 = vmatprep.subr.bf16.mxu0 0
  %138 = vmatpush1.bf16.msra.mxu0 0
  %139 = vmatprep.subr.bf16.mxu0 0
  %140 = vmatpush1.bf16.msra.mxu0 0
  %141 = vmatprep.subr.bf16.mxu0 0
  %142 = vmatpush1.bf16.msra.mxu0 0
  %143 = vmatprep.subr.bf16.mxu0 0
  %144 = vmatpush1.bf16.msra.mxu0 0
  %145 = vmatprep.subr.bf16.mxu0 0
  %146 = vmatpush1.bf16.msra.mxu0 0
  %147 = vmatprep.subr.bf16.mxu0 0
  %148 = vmatpush1.bf16.msra.mxu0 0
  %149 = vmatprep.mubr.bf16.mxu0 0
  %150 = vmatmul.mubr.bf16.gmra.mrb[0].mxu0 %v65
  %v151 = vpop.f32.mrb[0].mxu0
  %v152 = vadd.f32 %v57, %v151
  %v153 = vpop.f32.mrb[0].mxu0
  %v154 = vpop.f32.mrb[0].mxu0
  %v155 = vadd.f32 %v57, %v154
  %v156 = vpop.f32.mrb[0].mxu0
  %157 = vmatprep.mubr.bf16.mxu0 0
  %158 = vmatmul.mubr.bf16.gmra.mrb[0].mxu0 %v66
  %v159 = vpop.f32.mrb[0].mxu0
  %v160 = vadd.f32 %v57, %v159
  %v161 = vpop.f32.mrb[0].mxu0
  %v162 = vpop.f32.mrb[0].mxu0
  %v163 = vpop.f32.mrb[0].mxu0
  %164 = vdwg.mxu0
  %v165 = vmax.f32 %v152, 0.0
  %v166 = vmax.f32 %v155, 0.0
  %v167 = vmax.f32 %v160, 0.0
  %v169 = vrot.slane %v165, 1
  %v171 = vmax.f32 %v165, %v169
  %v173 = vrot.slane %v166, 1
  %v175 = vmax.f32 %v166, %v173
  %v177 = vrot.slane %v171, 2
  %178 = vrot.lane.b32.xlu0 %v177, 16
  %v179 = vpop.permute.xlu0 %178
  %v181 = vrot.slane %v171, 4
  %182 = vrot.lane.b32.xlu0 %v181, 32
  %v183 = vpop.permute.xlu0 %182
  %v185 = vrot.slane %v171, 6
  %186 = vrot.lane.b32.xlu0 %v185, 48
  %v187 = vpop.permute.xlu0 %186
  %190 = vrot.lane.b32.xlu0 %v175, 64
  %v191 = vpop.permute.xlu0 %190
  %vm193 = vcmask 130048
  %v194 = vsel %vm193, %v171, %v179
  %vm195 = vcmask 261120
  %v196 = vsel %vm195, %v194, %v183
  %vm197 = vcmask 392192
  %v198 = vsel %vm197, %v196, %v187
  %vm199 = vcmask 523264
  %v200 = vsel %vm199, %v198, %v191
  %vm201 = vcmask 654336
  %v202 = vsel %vm201, %v200, 0.0
  %v204 = vrot.slane %v167, 1
  %v206 = vmax.f32 %v167, %v204
  %v207 = vrot.slane %v175, 2
  %208 = vrot.lane.b32.xlu0 %v207, 16
  %v209 = vpop.permute.xlu0 %208
  %v211 = vrot.slane %v175, 4
  %212 = vrot.lane.b32.xlu0 %v211, 32
  %v213 = vpop.permute.xlu0 %212
  %v216 = vrot.slane %v206, 6
  %217 = vrot.lane.b32.xlu0 %v216, 48
  %v218 = vpop.permute.xlu0 %217
  %220 = vrot.lane.b32.xlu0 %v206, 64
  %v221 = vpop.permute.xlu0 %220
  %v223 = vsel %vm193, %v175, %v209
  %v224 = vsel %vm195, %v223, %v213
  %v225 = vsel %vm197, %v224, %v218
  %v226 = vsel %vm199, %v225, %v221
  %v227 = vsel %vm201, %v226, 0.0
  %v229 = vrot.slane %v227, 1
  %vm231 = vcmask 1040384
  %v232 = vsel %vm231, %v202, %v229
  %v233 = vpack.c.bf16 %v232, %v232
  %v234 = vld [vmem:[%s3] sm:$0xf]
  %v235 = vld [vmem:[%s3 + $0x4] sm:$0xf]
  %v236 = vld [vmem:[%s3 + $0x8] sm:$0xf]
  %v237 = vld [vmem:[%s3 + $0xc] sm:$0xf]
  %v238 = vld [vmem:[%s3 + $0x10] sm:$0xf]
  %v239 = vld [vmem:[%s3 + $0x14] sm:$0xf]
  %v240 = vld [vmem:[%s3 + $0x18] sm:$0xf]
  %v241 = vld [vmem:[%s3 + $0x1c] sm:$0xf]
  %v242 = vld [vmem:[%s3 + $0x20] sm:$0xf]
  %v243 = vld [vmem:[%s3 + $0x24] sm:$0xf]
  %v244 = vld [vmem:[%s3 + $0x28] sm:$0xf]
  %v245 = vld [vmem:[%s3 + $0x2c] sm:$0xf]
  %v246 = vld [vmem:[%s3 + $0x30] sm:$0xf]
  %v247 = vld [vmem:[%s3 + $0x34] sm:$0xf]
  %v248 = vld [vmem:[%s3 + $0x38] sm:$0xf]
  %v249 = vld [vmem:[%s3 + $0x3c] sm:$0xf]
  %v250 = vld [vmem:[%s4] sm:$0x1]
  %v252 = vlaneseq
  %v253 = vshrl.u32 %v252, 7
  %v254 = vsub.s32 0, %v253
  %v255 = vrot.slane %v250, %v254
  %v273 = vunpack.c.l.b16 %v234
  %v274 = vunpack.c.l.b16 %v235
  %v275 = vunpack.c.l.b16 %v236
  %v276 = vunpack.c.l.b16 %v237
  %v277 = vunpack.c.l.b16 %v238
  %v278 = vunpack.c.l.b16 %v239
  %v279 = vunpack.c.l.b16 %v240
  %v280 = vunpack.c.l.b16 %v241
  %v281 = vunpack.c.l.b16 %v242
  %v282 = vunpack.c.l.b16 %v243
  %v283 = vunpack.c.l.b16 %v244
  %v284 = vunpack.c.l.b16 %v245
  %v285 = vunpack.c.l.b16 %v246
  %v286 = vunpack.c.l.b16 %v247
  %v287 = vunpack.c.l.b16 %v248
  %v288 = vunpack.c.l.b16 %v249
  %v289 = vpack.c.b16 %v274, %v273
  %v290 = vpack.c.b16 %v276, %v275
  %v291 = vpack.c.b16 %v278, %v277
  %v292 = vpack.c.b16 %v280, %v279
  %v293 = vpack.c.b16 %v282, %v281
  %v294 = vpack.c.b16 %v284, %v283
  %v295 = vpack.c.b16 %v286, %v285
  %v296 = vpack.c.b16 %v288, %v287
  %305 = vmatprep.subr.bf16.mxu0 0
  %306 = vmatpush1.bf16.msra.mxu0 %v289
  %307 = vmatprep.subr.bf16.mxu0 0
  %308 = vmatpush1.bf16.msra.mxu0 %v290
  %309 = vmatprep.subr.bf16.mxu0 0
  %310 = vmatpush1.bf16.msra.mxu0 %v291
  %311 = vmatprep.subr.bf16.mxu0 0
  %312 = vmatpush1.bf16.msra.mxu0 %v292
  %313 = vmatprep.subr.bf16.mxu0 0
  %314 = vmatpush1.bf16.msra.mxu0 %v293
  %315 = vmatprep.subr.bf16.mxu0 0
  %316 = vmatpush1.bf16.msra.mxu0 %v294
  %317 = vmatprep.subr.bf16.mxu0 0
  %318 = vmatpush1.bf16.msra.mxu0 %v295
  %319 = vmatprep.subr.bf16.mxu0 0
  %320 = vmatpush1.bf16.msra.mxu0 %v296
  %321 = vmatprep.subr.bf16.mxu0 0
  %322 = vmatpush1.bf16.msra.mxu0 0
  %323 = vmatprep.subr.bf16.mxu0 0
  %324 = vmatpush1.bf16.msra.mxu0 0
  %325 = vmatprep.subr.bf16.mxu0 0
  %326 = vmatpush1.bf16.msra.mxu0 0
  %327 = vmatprep.subr.bf16.mxu0 0
  %328 = vmatpush1.bf16.msra.mxu0 0
  %329 = vmatprep.subr.bf16.mxu0 0
  %330 = vmatpush1.bf16.msra.mxu0 0
  %331 = vmatprep.subr.bf16.mxu0 0
  %332 = vmatpush1.bf16.msra.mxu0 0
  %333 = vmatprep.subr.bf16.mxu0 0
  %334 = vmatpush1.bf16.msra.mxu0 0
  %335 = vmatprep.subr.bf16.mxu0 0
  %336 = vmatpush1.bf16.msra.mxu0 0
  %337 = vmatprep.mubr.bf16.mxu0 0
  %338 = vmatmul.mubr.bf16.gmra.mrb[0].mxu0 %v233
  %v339 = vpop.f32.mrb[0].mxu0
  %v340 = vadd.f32 %v255, %v339
  %v341 = vpop.f32.mrb[0].mxu0
  %v342 = vpop.f32.mrb[0].mxu0
  %v343 = vpop.f32.mrb[0].mxu0
  %344 = vdwg.mxu0
  %v345 = vmax.f32 %v340, 0.0
  %v346 = vpack.c.bf16 %v345, %v345
  %v347 = vld [vmem:[%s5] sm:$0xf]
  %v348 = vld [vmem:[%s5 + $0x4] sm:$0xf]
  %v349 = vld [vmem:[%s5 + $0x8] sm:$0xf]
  %v350 = vld [vmem:[%s5 + $0xc] sm:$0xf]
  %v351 = vld [vmem:[%s6] sm:$0x1]
  %v353 = vlaneseq
  %v354 = vshrl.u32 %v353, 7
  %v355 = vsub.s32 0, %v354
  %v356 = vrot.slane %v351, %v355
  %v362 = vunpack.c.l.b16 %v347
  %v363 = vunpack.c.l.b16 %v348
  %v364 = vunpack.c.l.b16 %v349
  %v365 = vunpack.c.l.b16 %v350
  %v366 = vpack.c.b16 %v363, %v362
  %v367 = vpack.c.b16 %v365, %v364
  %v371 = vsel %vm195, %v346, 0
  %373 = vmatprep.subr.bf16.mxu0 0
  %374 = vmatpush1.bf16.msra.mxu0 %v366
  %375 = vmatprep.subr.bf16.mxu0 0
  %376 = vmatpush1.bf16.msra.mxu0 %v367
  %377 = vmatprep.subr.bf16.mxu0 0
  %378 = vmatpush1.bf16.msra.mxu0 0
  %379 = vmatprep.subr.bf16.mxu0 0
  %380 = vmatpush1.bf16.msra.mxu0 0
  %381 = vmatprep.subr.bf16.mxu0 0
  %382 = vmatpush1.bf16.msra.mxu0 0
  %383 = vmatprep.subr.bf16.mxu0 0
  %384 = vmatpush1.bf16.msra.mxu0 0
  %385 = vmatprep.subr.bf16.mxu0 0
  %386 = vmatpush1.bf16.msra.mxu0 0
  %387 = vmatprep.subr.bf16.mxu0 0
  %388 = vmatpush1.bf16.msra.mxu0 0
  %389 = vmatprep.subr.bf16.mxu0 0
  %390 = vmatpush1.bf16.msra.mxu0 0
  %391 = vmatprep.subr.bf16.mxu0 0
  %392 = vmatpush1.bf16.msra.mxu0 0
  %393 = vmatprep.subr.bf16.mxu0 0
  %394 = vmatpush1.bf16.msra.mxu0 0
  %395 = vmatprep.subr.bf16.mxu0 0
  %396 = vmatpush1.bf16.msra.mxu0 0
  %397 = vmatprep.subr.bf16.mxu0 0
  %398 = vmatpush1.bf16.msra.mxu0 0
  %399 = vmatprep.subr.bf16.mxu0 0
  %400 = vmatpush1.bf16.msra.mxu0 0
  %401 = vmatprep.subr.bf16.mxu0 0
  %402 = vmatpush1.bf16.msra.mxu0 0
  %403 = vmatprep.subr.bf16.mxu0 0
  %404 = vmatpush1.bf16.msra.mxu0 0
  %405 = vmatprep.mubr.bf16.mxu0 0
  %406 = vmatmul.mubr.bf16.gmra.mrb[0].mxu0 %v371
  %v407 = vpop.f32.mrb[0].mxu0
  %v408 = vadd.f32 %v356, %v407
  %v409 = vpop.f32.mrb[0].mxu0
  %v410 = vpop.f32.mrb[0].mxu0
  %v411 = vpop.f32.mrb[0].mxu0
  %412 = vdwg.mxu0
  %v413 = vmax.f32 %v408, 0.0
  %v414 = vpack.c.bf16 %v413, %v413
  %v415 = vld [vmem:[%s7] sm:$0xf]
  %v416 = vld [vmem:[%s7 + $0x4] sm:$0xf]
  %v417 = vld [vmem:[%s7 + $0x8] sm:$0xf]
  %v418 = vld [vmem:[%s7 + $0xc] sm:$0xf]
  %v419 = vld [vmem:[%s7 + $0x10] sm:$0xf]
  %v420 = vld [vmem:[%s7 + $0x14] sm:$0xf]
  %v421 = vld [vmem:[%s7 + $0x18] sm:$0xf]
  %v422 = vld [vmem:[%s7 + $0x1c] sm:$0xf]
  %v423 = vld [vmem:[%s7 + $0x20] sm:$0xf]
  %v424 = vld [vmem:[%s7 + $0x24] sm:$0xf]
  %v425 = vld [vmem:[%s7 + $0x28] sm:$0xf]
  %v426 = vld [vmem:[%s7 + $0x2c] sm:$0xf]
  %v427 = vld [vmem:[%s7 + $0x30] sm:$0xf]
  %v428 = vld [vmem:[%s7 + $0x34] sm:$0xf]
  %v429 = vld [vmem:[%s7 + $0x38] sm:$0xf]
  %v430 = vld [vmem:[%s7 + $0x3c] sm:$0xf]
  %v431 = vld [vmem:[%s8] sm:$0x1]
  %v433 = vlaneseq
  %v434 = vshrl.u32 %v433, 7
  %v435 = vsub.s32 0, %v434
  %v436 = vrot.slane %v431, %v435
  %v454 = vunpack.c.l.b16 %v415
  %v455 = vunpack.c.l.b16 %v416
  %v456 = vunpack.c.l.b16 %v417
  %v457 = vunpack.c.l.b16 %v418
  %v458 = vunpack.c.l.b16 %v419
  %v459 = vunpack.c.l.b16 %v420
  %v460 = vunpack.c.l.b16 %v421
  %v461 = vunpack.c.l.b16 %v422
  %v462 = vunpack.c.l.b16 %v423
  %v463 = vunpack.c.l.b16 %v424
  %v464 = vunpack.c.l.b16 %v425
  %v465 = vunpack.c.l.b16 %v426
  %v466 = vunpack.c.l.b16 %v427
  %v467 = vunpack.c.l.b16 %v428
  %v468 = vunpack.c.l.b16 %v429
  %v469 = vunpack.c.l.b16 %v430
  %v470 = vpack.c.b16 %v455, %v454
  %v471 = vpack.c.b16 %v457, %v456
  %v472 = vpack.c.b16 %v459, %v458
  %v473 = vpack.c.b16 %v461, %v460
  %v474 = vpack.c.b16 %v463, %v462
  %v475 = vpack.c.b16 %v465, %v464
  %v476 = vpack.c.b16 %v467, %v466
  %v477 = vpack.c.b16 %v469, %v468
  %486 = vmatprep.subr.bf16.mxu0 0
  %487 = vmatpush1.bf16.msra.mxu0 %v470
  %488 = vmatprep.subr.bf16.mxu0 0
  %489 = vmatpush1.bf16.msra.mxu0 %v471
  %490 = vmatprep.subr.bf16.mxu0 0
  %491 = vmatpush1.bf16.msra.mxu0 %v472
  %492 = vmatprep.subr.bf16.mxu0 0
  %493 = vmatpush1.bf16.msra.mxu0 %v473
  %494 = vmatprep.subr.bf16.mxu0 0
  %495 = vmatpush1.bf16.msra.mxu0 %v474
  %496 = vmatprep.subr.bf16.mxu0 0
  %497 = vmatpush1.bf16.msra.mxu0 %v475
  %498 = vmatprep.subr.bf16.mxu0 0
  %499 = vmatpush1.bf16.msra.mxu0 %v476
  %500 = vmatprep.subr.bf16.mxu0 0
  %501 = vmatpush1.bf16.msra.mxu0 %v477
  %502 = vmatprep.subr.bf16.mxu0 0
  %503 = vmatpush1.bf16.msra.mxu0 0
  %504 = vmatprep.subr.bf16.mxu0 0
  %505 = vmatpush1.bf16.msra.mxu0 0
  %506 = vmatprep.subr.bf16.mxu0 0
  %507 = vmatpush1.bf16.msra.mxu0 0
  %508 = vmatprep.subr.bf16.mxu0 0
  %509 = vmatpush1.bf16.msra.mxu0 0
  %510 = vmatprep.subr.bf16.mxu0 0
  %511 = vmatpush1.bf16.msra.mxu0 0
  %512 = vmatprep.subr.bf16.mxu0 0
  %513 = vmatpush1.bf16.msra.mxu0 0
  %514 = vmatprep.subr.bf16.mxu0 0
  %515 = vmatpush1.bf16.msra.mxu0 0
  %516 = vmatprep.subr.bf16.mxu0 0
  %517 = vmatpush1.bf16.msra.mxu0 0
  %518 = vmatprep.mubr.bf16.mxu0 0
  %519 = vmatmul.mubr.bf16.gmra.mrb[0].mxu0 %v414
  %v520 = vpop.f32.mrb[0].mxu0
  %v521 = vadd.f32 %v436, %v520
  %v522 = vpop.f32.mrb[0].mxu0
  %v523 = vpop.f32.mrb[0].mxu0
  %v524 = vpop.f32.mrb[0].mxu0
  %525 = vdwg.mxu0
  %526 = vst [vmem:[%s9] sm:$0x3] %v521
  // Predicated region
  $region38: #{dgcnn_forward.3} parent=0 // pred_check
    _
  $region39: #{dgcnn_forward.3} parent=0 // pred_check_branch
    %528 = sbr.rel (0) target = $region41
  $region40: #{dgcnn_forward.3} parent=0 // pred_region
    _
  $region41: #{dgcnn_forward.3} parent=0 // pred_fallthru
    _
  // Predicated region
  $region42: #{dgcnn_forward.3} parent=0 // pred_check
    _
  $region43: #{dgcnn_forward.3} parent=0 // pred_check_branch
    %530 = sbr.rel (0) target = $region45
  $region44: #{dgcnn_forward.3} parent=0 // pred_region
    _
  $region45: #{dgcnn_forward.3} parent=0 // pred_fallthru
    _

</llo_original>
